<compile_context>
chip_gen: v7x
topology: tpu7x:2x2x1
jax: 0.10.0
libtpu: 0.0.40
codegen_flags: <defaults>
</compile_context>

<pallas_src>
import functools

import jax
import jax.numpy as jnp
import numpy as np
from jax.experimental import pallas as pl
from jax.experimental.pallas import tpu as pltpu


def _round_up(x, m):
    return (x + m - 1) // m * m


def _vmem_limit_bytes():
    """Generation-aware scoped-VMEM limit: ~3/4 of capacity, capped at 100 MiB
    (v5e/v6e: 128 MiB -> 96 MiB; v7x: 64 MiB -> 48 MiB; unknown -> 48 MiB)."""
    cap = 64 * 1024 * 1024                                   # conservative default
    try:
        info = pltpu.get_tpu_info()
        cap = int(getattr(info, "vmem_capacity_bytes", cap))
    except Exception:
        pass
    return max(32 * 1024 * 1024, min(cap * 3 // 4, 100 * 1024 * 1024))


def _padded_dims(N, D):
    """Padding + tile sizes.

    Feature dim -> multiple of 128 lanes; rows -> multiple of 8 sublanes (256
    for large N so 256-wide MXU tiles are used on v6e/v7x).  The query tile is
    split in two whenever that stays sublane-aligned so the "parallel" axis
    has >= 2 steps and v7x's second TensorCore gets work.
    """
    DP = _round_up(D, 128)
    if N <= 256:
        NP = _round_up(N, 8)
        TQ = NP // 2 if (NP >= 16 and NP % 16 == 0) else NP
        TK = NP
    else:
        NP = _round_up(N, 256)
        TQ = 256
        TK = 256
    TR = min(NP, 256)                                        # projection row tile
    return NP, TQ, TK, TR, DP


# ----------------------------------------------------------------------------
# Stage 1: projections (computed ONCE, row-tiled)
# ----------------------------------------------------------------------------
def _proj_kernel(t_ref, v_ref, m_ref, wq_ref, bq_ref, wk_ref, bk_ref,
                 wv_ref, bv_ref, q_ref, kt_ref, kv_ref, km_ref, vm_ref,
                 *, modal, n_valid, n_pad, tile_rows):
    f32 = jnp.float32
    t_in, v_in, m_in = t_ref[...], v_ref[...], m_ref[...]
    wk, bk = wk_ref[...], bk_ref[...]

    xq = (t_in, v_in, m_in)[modal]                           # static modal select
    # 1/scale already folded into wq/bq at param-prep time.
    q = jnp.dot(xq, wq_ref[...], preferred_element_type=f32) + bq_ref[...]
    kt = jnp.dot(t_in, wk, preferred_element_type=f32) + bk
    kv = jnp.dot(v_in, wk, preferred_element_type=f32) + bk
    km = jnp.dot(m_in, wk, preferred_element_type=f32) + bk
    vm = jnp.dot(m_in, wv_ref[...], preferred_element_type=f32) + bv_ref[...]

    if n_pad != n_valid:
        # Zero padded key rows of v_m ONCE (the modality softmax does not
        # renormalize over keys, so zero v_m rows make padded keys contribute 0).
        row = (pl.program_id(0) * tile_rows
               + jax.lax.broadcasted_iota(jnp.int32, (tile_rows, 1), 0))
        vm = jnp.where(row < n_valid, vm, 0.0)

    q_ref[...] = q.astype(q_ref.dtype)
    kt_ref[...] = kt.astype(kt_ref.dtype)
    kv_ref[...] = kv.astype(kv_ref.dtype)
    km_ref[...] = km.astype(km_ref.dtype)
    vm_ref[...] = vm.astype(vm_ref.dtype)


# ----------------------------------------------------------------------------
# Stage 2: attention, (query-tile, key-tile) grid with f32 accumulators
# ----------------------------------------------------------------------------
def _attn_kernel(q_ref, kt_ref, kv_ref, km_ref, vm_ref, out_ref,
                 acc_t, acc_v, acc_m, *, dp):
    f32, bf16 = jnp.float32, jnp.bfloat16
    j = pl.program_id(1)

    @pl.when(j == 0)
    def _():
        acc_t[...] = jnp.zeros_like(acc_t)
        acc_v[...] = jnp.zeros_like(acc_v)
        acc_m[...] = jnp.zeros_like(acc_m)

    q = q_ref[...]                                           # bf16 [TQ, DP]
    nt = (((1,), (1,)), ((), ()))                            # a @ b.T (MXU-consumed)
    s_t = jax.lax.dot_general(q, kt_ref[...], nt, preferred_element_type=f32)
    s_v = jax.lax.dot_general(q, kv_ref[...], nt, preferred_element_type=f32)
    s_m = jax.lax.dot_general(q, km_ref[...], nt, preferred_element_type=f32)

    # Softmax over the 3 modalities per (query, key) -> key blocks independent.
    mx = jnp.maximum(jnp.maximum(s_t, s_v), s_m)
    e_t = jnp.exp(s_t - mx)
    e_v = jnp.exp(s_v - mx)
    e_m = jnp.exp(s_m - mx)
    inv = pl.reciprocal(e_t + e_v + e_m, approx=True)        # EUP slot (~free)

    vm = vm_ref[...]                                         # bf16 [TK, DP], MXU-stationary
    acc_t[...] += jnp.dot((e_t * inv).astype(bf16), vm, preferred_element_type=f32)
    acc_v[...] += jnp.dot((e_v * inv).astype(bf16), vm, preferred_element_type=f32)
    acc_m[...] += jnp.dot((e_m * inv).astype(bf16), vm, preferred_element_type=f32)

    @pl.when(j == pl.num_programs(1) - 1)
    def _():
        # dp is a multiple of 128 -> lane-aligned direct slice stores (no concat).
        out_ref[:, 0 * dp:1 * dp] = acc_t[...].astype(out_ref.dtype)
        out_ref[:, 1 * dp:2 * dp] = acc_v[...].astype(out_ref.dtype)
        out_ref[:, 2 * dp:3 * dp] = acc_m[...].astype(out_ref.dtype)


# ----------------------------------------------------------------------------
# Params
# ----------------------------------------------------------------------------
def init_params(key, in_dim):
    """Deterministic init mimicking nn.Linear defaults (uniform(+-1/sqrt(d)))."""
    bound = 1.0 / np.sqrt(in_dim)
    ks = jax.random.split(key, 6)
    wq = jax.random.uniform(ks[0], (in_dim, in_dim), jnp.float32, -bound, bound)
    bq = jax.random.uniform(ks[1], (in_dim,), jnp.float32, -bound, bound)
    wk = jax.random.uniform(ks[2], (in_dim, in_dim), jnp.float32, -bound, bound)
    bk = jax.random.uniform(ks[3], (in_dim,), jnp.float32, -bound, bound)
    wv = jax.random.uniform(ks[4], (in_dim, in_dim), jnp.float32, -bound, bound)
    bv = jax.random.uniform(ks[5], (in_dim,), jnp.float32, -bound, bound)
    scale = jnp.array([1.0], dtype=jnp.float32)
    # wq/wk/wv are PyTorch [out, in] and map to the q_t / k_t / v_t layers.
    return dict(wq=wq, bq=bq, wk=wk, bk=bk, wv=wv, bv=bv, scale=scale)


def prepare_kernel_params(params, in_dim):
    """One-time prep (hoisted out of the forward): transpose to [in, out], fold
    1/scale into the q projection, zero-pad features to a lane multiple, cast
    weights to bf16 (accumulation stays f32 inside the kernels)."""
    DP = _round_up(in_dim, 128)
    pad = DP - in_dim
    s = params["scale"][0]

    def prep_w(w):                       # torch [out, in] -> [Dp, Dp]
        return jnp.pad(w.T, ((0, pad), (0, pad))).astype(jnp.bfloat16)

    def prep_b(b):                       # [D] -> [1, Dp], kept f32
        return jnp.pad(b, (0, pad)).reshape(1, DP).astype(jnp.float32)

    return dict(
        wq=prep_w(params["wq"] / s), bq=prep_b(params["bq"] / s),
        wk=prep_w(params["wk"]),     bk=prep_b(params["bk"]),
        wv=prep_w(params["wv"]),     bv=prep_b(params["bv"]),
    )


# ----------------------------------------------------------------------------
# Forward
# ----------------------------------------------------------------------------
@functools.partial(jax.jit, static_argnums=(4,))
def attention_module_forward(kparams, t, v, m, modal):
    """Forward of AttentionModule. Returns (literal 0, attention output [N,3,D])."""
    N, D = t.shape
    NP, TQ, TK, TR, DP = _padded_dims(N, D)
    vmem_limit = _vmem_limit_bytes()

    def pad_x(x):
        return jnp.pad(x, ((0, NP - N), (0, DP - D))).astype(jnp.bfloat16)

    # Three separate inputs (no wrapper concat / extra HBM round trip).
    tp, vp, mp = pad_x(t), pad_x(v), pad_x(m)

    # ---- Stage 1: projections, once ----------------------------------------
    row_spec = pl.BlockSpec((TR, DP), lambda i: (i, 0))
    w_spec = pl.BlockSpec((DP, DP), lambda i: (0, 0))
    b_spec = pl.BlockSpec((1, DP), lambda i: (0, 0))

    proj_cost = pl.CostEstimate(
        flops=10 * NP * DP * DP,
        transcendentals=0,
        bytes_accessed=(3 * NP * DP + 3 * DP * DP + 5 * NP * DP) * 2 + 3 * DP * 4)

    q, k_t, k_v, k_m, v_m = pl.pallas_call(
        functools.partial(_proj_kernel, modal=modal, n_valid=N, n_pad=NP,
                          tile_rows=TR),
        out_shape=tuple(jax.ShapeDtypeStruct((NP, DP), jnp.bfloat16)
                        for _ in range(5)),
        grid_spec=pltpu.PrefetchScalarGridSpec(
            num_scalar_prefetch=0,
            grid=(NP // TR,),
            in_specs=[row_spec, row_spec, row_spec,
                      w_spec, b_spec, w_spec, b_spec, w_spec, b_spec],
            out_specs=tuple(pl.BlockSpec((TR, DP), lambda i: (i, 0))
                            for _ in range(5)),
        ),
        compiler_params=pltpu.CompilerParams(
            dimension_semantics=("parallel",),
            vmem_limit_bytes=vmem_limit),
        cost_estimate=proj_cost,
    )(tp, vp, mp, kparams["wq"], kparams["bq"], kparams["wk"], kparams["bk"],
      kparams["wv"], kparams["bv"])

    # ---- Stage 2: attention over (query, key) tiles -------------------------
    q_spec = pl.BlockSpec((TQ, DP), lambda i, j: (i, 0))
    key_spec = pl.BlockSpec((TK, DP), lambda i, j: (j, 0))

    attn_cost = pl.CostEstimate(
        flops=12 * NP * NP * DP,
        transcendentals=4 * NP * NP,
        bytes_accessed=(5 * NP * DP + 3 * NP * DP) * 2)

    out_slab = pl.pallas_call(
        functools.partial(_attn_kernel, dp=DP),
        out_shape=jax.ShapeDtypeStruct((NP, 3 * DP), jnp.bfloat16),
        grid_spec=pltpu.PrefetchScalarGridSpec(
            num_scalar_prefetch=0,
            grid=(NP // TQ, NP // TK),
            in_specs=[q_spec, key_spec, key_spec, key_spec, key_spec],
            out_specs=pl.BlockSpec((TQ, 3 * DP), lambda i, j: (i, 0)),
            scratch_shapes=[pltpu.VMEM((TQ, DP), jnp.float32)] * 3,
        ),
        compiler_params=pltpu.CompilerParams(
            dimension_semantics=("parallel", "arbitrary"),
            vmem_limit_bytes=vmem_limit),
        cost_estimate=attn_cost,
    )(q, k_t, k_v, k_m, v_m)

    # Lane-dense slab -> free reshape; no HBM round-trip transpose.
    attn_out = out_slab[:N].reshape(N, 3, DP)[:, :, :D].astype(jnp.float32)
    return 0, attn_out                                       # torch returns 0


# ----------------------------------------------------------------------------
# Pure-JAX reference (mirrors the kernel's bf16-operand / f32-accum precision)
# ----------------------------------------------------------------------------
def _reference(params, t, v, m, modal):
    f32, bf16 = jnp.float32, jnp.bfloat16

    def lin(x, w, b):        # torch Linear with bf16 MXU operands, f32 accum
        y = jax.lax.dot_general(x.astype(bf16), w.T.astype(bf16),
                                (((1,), (0,)), ((), ())),
                                preferred_element_type=f32) + b
        return y.astype(bf16)                                # kernel stores bf16

    def dot_nt(a, b):        # a @ b.T
        return jax.lax.dot_general(a, b, (((1,), (1,)), ((), ())),
                                   preferred_element_type=f32)

    s = params["scale"][0]
    xq = (t, v, m)[modal]
    q = lin(xq, params["wq"] / s, params["bq"] / s)          # scale folded, as kernel
    kt = lin(t, params["wk"], params["bk"])
    kv = lin(v, params["wk"], params["bk"])
    km = lin(m, params["wk"], params["bk"])
    vm = lin(m, params["wv"], params["bv"])
    att = jnp.stack([dot_nt(q, kt), dot_nt(q, kv), dot_nt(q, km)], axis=1)  # [N,3,N]
    w = jax.nn.softmax(att, axis=1)                          # softmax over modality
    return jnp.einsum("nsj,jd->nsd", w.astype(bf16), vm,
                      preferred_element_type=f32)            # [N,3,D]


if __name__ == "__main__":
    N, D = 8, 32
    key = jax.random.PRNGKey(0)
    kp, kt_, kv_, km_ = jax.random.split(key, 4)
    params = init_params(kp, D)
    t = jax.random.normal(kt_, (N, D), jnp.float32)
    v = jax.random.normal(kv_, (N, D), jnp.float32)
    m = jax.random.normal(km_, (N, D), jnp.float32)
    modal = 0

    kparams = prepare_kernel_params(params, D)               # hoisted one-time prep
    zero, attn_out = attention_module_forward(kparams, t, v, m, modal)
    attn_out = jax.block_until_ready(attn_out)

    ref = _reference(params, t, v, m, modal)
    # bf16 MXU operands/outputs + approx reciprocal => relaxed tolerance vs f32.
    np.testing.assert_allclose(np.asarray(attn_out, dtype=np.float32),
                               np.asarray(ref, dtype=np.float32),
                               rtol=1e-2, atol=1e-2)
    assert int(zero) == 0
    print("KERNEL_OK")
</pallas_src>

<mosaic_0001>
module attributes {stable_mosaic.version = 11 : i64} {
  func.func @_proj_kernel(%arg0: i32, %arg1: memref<8x128xbf16, #tpu.memory_space<vmem>>, %arg2: memref<8x128xbf16, #tpu.memory_space<vmem>>, %arg3: memref<8x128xbf16, #tpu.memory_space<vmem>>, %arg4: memref<128x128xbf16, #tpu.memory_space<vmem>>, %arg5: memref<1x128xf32, #tpu.memory_space<vmem>>, %arg6: memref<128x128xbf16, #tpu.memory_space<vmem>>, %arg7: memref<1x128xf32, #tpu.memory_space<vmem>>, %arg8: memref<128x128xbf16, #tpu.memory_space<vmem>>, %arg9: memref<1x128xf32, #tpu.memory_space<vmem>>, %arg10: memref<8x128xbf16, #tpu.memory_space<vmem>>, %arg11: memref<8x128xbf16, #tpu.memory_space<vmem>>, %arg12: memref<8x128xbf16, #tpu.memory_space<vmem>>, %arg13: memref<8x128xbf16, #tpu.memory_space<vmem>>, %arg14: memref<8x128xbf16, #tpu.memory_space<vmem>>) attributes {dimension_semantics = [#tpu.dimension_semantics<parallel>], iteration_bounds = array<i64: 1>, scalar_prefetch = 0 : i64, scratch_operands = 0 : i64, tpu.core_type = #tpu.core_type<tc>, window_params = [{transform_indices = @transform_0, window_bounds = array<i64: 8, 128>}, {transform_indices = @transform_1, window_bounds = array<i64: 8, 128>}, {transform_indices = @transform_2, window_bounds = array<i64: 8, 128>}, {pipeline_mode = #tpu.pipeline_mode<synchronous>, transform_indices = @transform_3, window_bounds = array<i64: 128, 128>}, {pipeline_mode = #tpu.pipeline_mode<synchronous>, transform_indices = @transform_4, window_bounds = array<i64: 1, 128>}, {pipeline_mode = #tpu.pipeline_mode<synchronous>, transform_indices = @transform_5, window_bounds = array<i64: 128, 128>}, {pipeline_mode = #tpu.pipeline_mode<synchronous>, transform_indices = @transform_6, window_bounds = array<i64: 1, 128>}, {pipeline_mode = #tpu.pipeline_mode<synchronous>, transform_indices = @transform_7, window_bounds = array<i64: 128, 128>}, {pipeline_mode = #tpu.pipeline_mode<synchronous>, transform_indices = @transform_8, window_bounds = array<i64: 1, 128>}, {transform_indices = @transform_9, window_bounds = array<i64: 8, 128>}, {transform_indices = @transform_10, window_bounds = array<i64: 8, 128>}, {transform_indices = @transform_11, window_bounds = array<i64: 8, 128>}, {transform_indices = @transform_12, window_bounds = array<i64: 8, 128>}, {transform_indices = @transform_13, window_bounds = array<i64: 8, 128>}]} {
    %c0 = arith.constant 0 : index
    %c0_0 = arith.constant 0 : index
    %0 = vector.load %arg1[%c0, %c0_0] : memref<8x128xbf16, #tpu.memory_space<vmem>>, vector<8x128xbf16>
    %c0_1 = arith.constant 0 : index
    %c0_2 = arith.constant 0 : index
    %1 = vector.load %arg2[%c0_1, %c0_2] : memref<8x128xbf16, #tpu.memory_space<vmem>>, vector<8x128xbf16>
    %c0_3 = arith.constant 0 : index
    %c0_4 = arith.constant 0 : index
    %2 = vector.load %arg3[%c0_3, %c0_4] : memref<8x128xbf16, #tpu.memory_space<vmem>>, vector<8x128xbf16>
    %c0_5 = arith.constant 0 : index
    %c0_6 = arith.constant 0 : index
    %3 = vector.load %arg6[%c0_5, %c0_6] : memref<128x128xbf16, #tpu.memory_space<vmem>>, vector<128x128xbf16>
    %c0_7 = arith.constant 0 : index
    %c0_8 = arith.constant 0 : index
    %4 = vector.load %arg7[%c0_7, %c0_8] : memref<1x128xf32, #tpu.memory_space<vmem>>, vector<1x128xf32>
    %c0_9 = arith.constant 0 : index
    %c0_10 = arith.constant 0 : index
    %5 = vector.load %arg4[%c0_9, %c0_10] : memref<128x128xbf16, #tpu.memory_space<vmem>>, vector<128x128xbf16>
    %cst = arith.constant dense<0.000000e+00> : vector<8x128xf32>
    %6 = tpu.matmul %0, %5, %cst {dimension_numbers = #tpu.dot_dimension_numbers<[1], [0], [0], [1], [0, 0, 1, 1], [], []>} : vector<8x128xbf16>, vector<128x128xbf16>, vector<8x128xf32> -> vector<8x128xf32>
    %c0_11 = arith.constant 0 : index
    %c0_12 = arith.constant 0 : index
    %7 = vector.load %arg5[%c0_11, %c0_12] : memref<1x128xf32, #tpu.memory_space<vmem>>, vector<1x128xf32>
    %8 = vector.broadcast %7 : vector<1x128xf32> to vector<8x128xf32>
    %9 = arith.addf %6, %8 : vector<8x128xf32>
    %cst_13 = arith.constant dense<0.000000e+00> : vector<8x128xf32>
    %10 = tpu.matmul %0, %3, %cst_13 {dimension_numbers = #tpu.dot_dimension_numbers<[1], [0], [0], [1], [0, 0, 1, 1], [], []>} : vector<8x128xbf16>, vector<128x128xbf16>, vector<8x128xf32> -> vector<8x128xf32>
    %11 = vector.broadcast %4 : vector<1x128xf32> to vector<8x128xf32>
    %12 = arith.addf %10, %11 : vector<8x128xf32>
    %cst_14 = arith.constant dense<0.000000e+00> : vector<8x128xf32>
    %13 = tpu.matmul %1, %3, %cst_14 {dimension_numbers = #tpu.dot_dimension_numbers<[1], [0], [0], [1], [0, 0, 1, 1], [], []>} : vector<8x128xbf16>, vector<128x128xbf16>, vector<8x128xf32> -> vector<8x128xf32>
    %14 = vector.broadcast %4 : vector<1x128xf32> to vector<8x128xf32>
    %15 = arith.addf %13, %14 : vector<8x128xf32>
    %cst_15 = arith.constant dense<0.000000e+00> : vector<8x128xf32>
    %16 = tpu.matmul %2, %3, %cst_15 {dimension_numbers = #tpu.dot_dimension_numbers<[1], [0], [0], [1], [0, 0, 1, 1], [], []>} : vector<8x128xbf16>, vector<128x128xbf16>, vector<8x128xf32> -> vector<8x128xf32>
    %17 = vector.broadcast %4 : vector<1x128xf32> to vector<8x128xf32>
    %18 = arith.addf %16, %17 : vector<8x128xf32>
    %c0_16 = arith.constant 0 : index
    %c0_17 = arith.constant 0 : index
    %19 = vector.load %arg8[%c0_16, %c0_17] : memref<128x128xbf16, #tpu.memory_space<vmem>>, vector<128x128xbf16>
    %cst_18 = arith.constant dense<0.000000e+00> : vector<8x128xf32>
    %20 = tpu.matmul %2, %19, %cst_18 {dimension_numbers = #tpu.dot_dimension_numbers<[1], [0], [0], [1], [0, 0, 1, 1], [], []>} : vector<8x128xbf16>, vector<128x128xbf16>, vector<8x128xf32> -> vector<8x128xf32>
    %c0_19 = arith.constant 0 : index
    %c0_20 = arith.constant 0 : index
    %21 = vector.load %arg9[%c0_19, %c0_20] : memref<1x128xf32, #tpu.memory_space<vmem>>, vector<1x128xf32>
    %22 = vector.broadcast %21 : vector<1x128xf32> to vector<8x128xf32>
    %23 = arith.addf %20, %22 : vector<8x128xf32>
    %24 = arith.truncf %9 : vector<8x128xf32> to vector<8x128xbf16>
    %c0_21 = arith.constant 0 : index
    %c0_22 = arith.constant 0 : index
    %25 = vector.load %arg10[%c0_21, %c0_22] : memref<8x128xbf16, #tpu.memory_space<vmem>>, vector<8x128xbf16>
    tpu.vector_store %arg10[%c0_21, %c0_22], %24 {strides = array<i32>} : memref<8x128xbf16, #tpu.memory_space<vmem>>, vector<8x128xbf16>,
    %26 = arith.truncf %12 : vector<8x128xf32> to vector<8x128xbf16>
    %c0_23 = arith.constant 0 : index
    %c0_24 = arith.constant 0 : index
    %27 = vector.load %arg11[%c0_23, %c0_24] : memref<8x128xbf16, #tpu.memory_space<vmem>>, vector<8x128xbf16>
    tpu.vector_store %arg11[%c0_23, %c0_24], %26 {strides = array<i32>} : memref<8x128xbf16, #tpu.memory_space<vmem>>, vector<8x128xbf16>,
    %28 = arith.truncf %15 : vector<8x128xf32> to vector<8x128xbf16>
    %c0_25 = arith.constant 0 : index
    %c0_26 = arith.constant 0 : index
    %29 = vector.load %arg12[%c0_25, %c0_26] : memref<8x128xbf16, #tpu.memory_space<vmem>>, vector<8x128xbf16>
    tpu.vector_store %arg12[%c0_25, %c0_26], %28 {strides = array<i32>} : memref<8x128xbf16, #tpu.memory_space<vmem>>, vector<8x128xbf16>,
    %30 = arith.truncf %18 : vector<8x128xf32> to vector<8x128xbf16>
    %c0_27 = arith.constant 0 : index
    %c0_28 = arith.constant 0 : index
    %31 = vector.load %arg13[%c0_27, %c0_28] : memref<8x128xbf16, #tpu.memory_space<vmem>>, vector<8x128xbf16>
    tpu.vector_store %arg13[%c0_27, %c0_28], %30 {strides = array<i32>} : memref<8x128xbf16, #tpu.memory_space<vmem>>, vector<8x128xbf16>,
    %32 = arith.truncf %23 : vector<8x128xf32> to vector<8x128xbf16>
    %c0_29 = arith.constant 0 : index
    %c0_30 = arith.constant 0 : index
    %33 = vector.load %arg14[%c0_29, %c0_30] : memref<8x128xbf16, #tpu.memory_space<vmem>>, vector<8x128xbf16>
    tpu.vector_store %arg14[%c0_29, %c0_30], %32 {strides = array<i32>} : memref<8x128xbf16, #tpu.memory_space<vmem>>, vector<8x128xbf16>,
    return
  }
  func.func @transform_0(%arg0: i32) -> (i32, i32) {
    %c0_i32 = arith.constant 0 : i32
    %c0_i32_0 = arith.constant 0 : i32
    return %arg0, %c0_i32 : i32, i32
  }
  func.func @transform_1(%arg0: i32) -> (i32, i32) {
    %c0_i32 = arith.constant 0 : i32
    %c0_i32_0 = arith.constant 0 : i32
    return %arg0, %c0_i32 : i32, i32
  }
  func.func @transform_2(%arg0: i32) -> (i32, i32) {
    %c0_i32 = arith.constant 0 : i32
    %c0_i32_0 = arith.constant 0 : i32
    return %arg0, %c0_i32 : i32, i32
  }
  func.func @transform_3(%arg0: i32) -> (i32, i32) {
    %c0_i32 = arith.constant 0 : i32
    %c0_i32_0 = arith.constant 0 : i32
    %c0_i32_1 = arith.constant 0 : i32
    return %c0_i32, %c0_i32_0 : i32, i32
  }
  func.func @transform_4(%arg0: i32) -> (i32, i32) {
    %c0_i32 = arith.constant 0 : i32
    %c0_i32_0 = arith.constant 0 : i32
    %c0_i32_1 = arith.constant 0 : i32
    return %c0_i32, %c0_i32_0 : i32, i32
  }
  func.func @transform_5(%arg0: i32) -> (i32, i32) {
    %c0_i32 = arith.constant 0 : i32
    %c0_i32_0 = arith.constant 0 : i32
    %c0_i32_1 = arith.constant 0 : i32
    return %c0_i32, %c0_i32_0 : i32, i32
  }
  func.func @transform_6(%arg0: i32) -> (i32, i32) {
    %c0_i32 = arith.constant 0 : i32
    %c0_i32_0 = arith.constant 0 : i32
    %c0_i32_1 = arith.constant 0 : i32
    return %c0_i32, %c0_i32_0 : i32, i32
  }
  func.func @transform_7(%arg0: i32) -> (i32, i32) {
    %c0_i32 = arith.constant 0 : i32
    %c0_i32_0 = arith.constant 0 : i32
    %c0_i32_1 = arith.constant 0 : i32
    return %c0_i32, %c0_i32_0 : i32, i32
  }
  func.func @transform_8(%arg0: i32) -> (i32, i32) {
    %c0_i32 = arith.constant 0 : i32
    %c0_i32_0 = arith.constant 0 : i32
    %c0_i32_1 = arith.constant 0 : i32
    return %c0_i32, %c0_i32_0 : i32, i32
  }
  func.func @transform_9(%arg0: i32) -> (i32, i32) {
    %c0_i32 = arith.constant 0 : i32
    %c0_i32_0 = arith.constant 0 : i32
    return %arg0, %c0_i32 : i32, i32
  }
  func.func @transform_10(%arg0: i32) -> (i32, i32) {
    %c0_i32 = arith.constant 0 : i32
    %c0_i32_0 = arith.constant 0 : i32
    return %arg0, %c0_i32 : i32, i32
  }
  func.func @transform_11(%arg0: i32) -> (i32, i32) {
    %c0_i32 = arith.constant 0 : i32
    %c0_i32_0 = arith.constant 0 : i32
    return %arg0, %c0_i32 : i32, i32
  }
  func.func @transform_12(%arg0: i32) -> (i32, i32) {
    %c0_i32 = arith.constant 0 : i32
    %c0_i32_0 = arith.constant 0 : i32
    return %arg0, %c0_i32 : i32, i32
  }
  func.func @transform_13(%arg0: i32) -> (i32, i32) {
    %c0_i32 = arith.constant 0 : i32
    %c0_i32_0 = arith.constant 0 : i32
    return %arg0, %c0_i32 : i32, i32
  }
}

module attributes {stable_mosaic.version = 11 : i64} {
  func.func @_attn_kernel(%arg0: i32, %arg1: i32, %arg2: memref<8x128xbf16, #tpu.memory_space<vmem>>, %arg3: memref<8x128xbf16, #tpu.memory_space<vmem>>, %arg4: memref<8x128xbf16, #tpu.memory_space<vmem>>, %arg5: memref<8x128xbf16, #tpu.memory_space<vmem>>, %arg6: memref<8x128xbf16, #tpu.memory_space<vmem>>, %arg7: memref<8x384xbf16, #tpu.memory_space<vmem>>, %arg8: memref<8x128xf32, #tpu.memory_space<vmem>>, %arg9: memref<8x128xf32, #tpu.memory_space<vmem>>, %arg10: memref<8x128xf32, #tpu.memory_space<vmem>>) attributes {dimension_semantics = [#tpu.dimension_semantics<parallel>, #tpu.dimension_semantics<arbitrary>], iteration_bounds = array<i64: 1, 1>, scalar_prefetch = 0 : i64, scratch_operands = 3 : i64, tpu.core_type = #tpu.core_type<tc>, window_params = [{transform_indices = @transform_0, window_bounds = array<i64: 8, 128>}, {transform_indices = @transform_1, window_bounds = array<i64: 8, 128>}, {transform_indices = @transform_2, window_bounds = array<i64: 8, 128>}, {transform_indices = @transform_3, window_bounds = array<i64: 8, 128>}, {transform_indices = @transform_4, window_bounds = array<i64: 8, 128>}, {transform_indices = @transform_5, window_bounds = array<i64: 8, 384>}]} {
    %c0_i32 = arith.constant 0 : i32
    %0 = arith.cmpi eq, %arg1, %c0_i32 : i32
    %1 = arith.extui %0 : i1 to i32
    %c0_i32_0 = arith.constant 0 : i32
    %2 = arith.cmpi ne, %1, %c0_i32_0 : i32
    scf.if %2 {
      %cst_29 = arith.constant 0.000000e+00 : f32
      %43 = vector.broadcast %cst_29 : f32 to vector<8x128xf32>
      %c0_30 = arith.constant 0 : index
      %c0_31 = arith.constant 0 : index
      %44 = vector.load %arg8[%c0_30, %c0_31] : memref<8x128xf32, #tpu.memory_space<vmem>>, vector<8x128xf32>
      tpu.vector_store %arg8[%c0_30, %c0_31], %43 {strides = array<i32>} : memref<8x128xf32, #tpu.memory_space<vmem>>, vector<8x128xf32>,
      %cst_32 = arith.constant 0.000000e+00 : f32
      %45 = vector.broadcast %cst_32 : f32 to vector<8x128xf32>
      %c0_33 = arith.constant 0 : index
      %c0_34 = arith.constant 0 : index
      %46 = vector.load %arg9[%c0_33, %c0_34] : memref<8x128xf32, #tpu.memory_space<vmem>>, vector<8x128xf32>
      tpu.vector_store %arg9[%c0_33, %c0_34], %45 {strides = array<i32>} : memref<8x128xf32, #tpu.memory_space<vmem>>, vector<8x128xf32>,
      %cst_35 = arith.constant 0.000000e+00 : f32
      %47 = vector.broadcast %cst_35 : f32 to vector<8x128xf32>
      %c0_36 = arith.constant 0 : index
      %c0_37 = arith.constant 0 : index
      %48 = vector.load %arg10[%c0_36, %c0_37] : memref<8x128xf32, #tpu.memory_space<vmem>>, vector<8x128xf32>
      tpu.vector_store %arg10[%c0_36, %c0_37], %47 {strides = array<i32>} : memref<8x128xf32, #tpu.memory_space<vmem>>, vector<8x128xf32>,
    } else {
    }
    %c0 = arith.constant 0 : index
    %c0_1 = arith.constant 0 : index
    %3 = vector.load %arg2[%c0, %c0_1] : memref<8x128xbf16, #tpu.memory_space<vmem>>, vector<8x128xbf16>
    %c0_2 = arith.constant 0 : index
    %c0_3 = arith.constant 0 : index
    %4 = vector.load %arg3[%c0_2, %c0_3] : memref<8x128xbf16, #tpu.memory_space<vmem>>, vector<8x128xbf16>
    %cst = arith.constant dense<0.000000e+00> : vector<8x8xf32>
    %5 = tpu.matmul %3, %4, %cst {dimension_numbers = #tpu.dot_dimension_numbers<[1], [1], [0], [0], [0, 0, 1, 0], [], []>} : vector<8x128xbf16>, vector<8x128xbf16>, vector<8x8xf32> -> vector<8x8xf32>
    %c0_4 = arith.constant 0 : index
    %c0_5 = arith.constant 0 : index
    %6 = vector.load %arg4[%c0_4, %c0_5] : memref<8x128xbf16, #tpu.memory_space<vmem>>, vector<8x128xbf16>
    %cst_6 = arith.constant dense<0.000000e+00> : vector<8x8xf32>
    %7 = tpu.matmul %3, %6, %cst_6 {dimension_numbers = #tpu.dot_dimension_numbers<[1], [1], [0], [0], [0, 0, 1, 0], [], []>} : vector<8x128xbf16>, vector<8x128xbf16>, vector<8x8xf32> -> vector<8x8xf32>
    %c0_7 = arith.constant 0 : index
    %c0_8 = arith.constant 0 : index
    %8 = vector.load %arg5[%c0_7, %c0_8] : memref<8x128xbf16, #tpu.memory_space<vmem>>, vector<8x128xbf16>
    %cst_9 = arith.constant dense<0.000000e+00> : vector<8x8xf32>
    %9 = tpu.matmul %3, %8, %cst_9 {dimension_numbers = #tpu.dot_dimension_numbers<[1], [1], [0], [0], [0, 0, 1, 0], [], []>} : vector<8x128xbf16>, vector<8x128xbf16>, vector<8x8xf32> -> vector<8x8xf32>
    %10 = arith.maximumf %5, %7 : vector<8x8xf32>
    %11 = arith.maximumf %10, %9 : vector<8x8xf32>
    %12 = arith.subf %5, %11 : vector<8x8xf32>
    %13 = math.exp %12 : vector<8x8xf32>
    %14 = arith.subf %7, %11 : vector<8x8xf32>
    %15 = math.exp %14 : vector<8x8xf32>
    %16 = arith.subf %9, %11 : vector<8x8xf32>
    %17 = math.exp %16 : vector<8x8xf32>
    %18 = arith.addf %13, %15 : vector<8x8xf32>
    %19 = arith.addf %18, %17 : vector<8x8xf32>
    %20 = tpu.reciprocal %19 {approx = true} : vector<8x8xf32> -> vector<8x8xf32>
    %c0_10 = arith.constant 0 : index
    %c0_11 = arith.constant 0 : index
    %21 = vector.load %arg6[%c0_10, %c0_11] : memref<8x128xbf16, #tpu.memory_space<vmem>>, vector<8x128xbf16>
    %c0_12 = arith.constant 0 : index
    %c0_13 = arith.constant 0 : index
    %22 = vector.load %arg8[%c0_12, %c0_13] : memref<8x128xf32, #tpu.memory_space<vmem>>, vector<8x128xf32>
    %23 = arith.mulf %13, %20 : vector<8x8xf32>
    %24 = arith.truncf %23 : vector<8x8xf32> to vector<8x8xbf16>
    %cst_14 = arith.constant dense<0.000000e+00> : vector<8x128xf32>
    %25 = tpu.matmul %24, %21, %cst_14 {dimension_numbers = #tpu.dot_dimension_numbers<[1], [0], [0], [1], [0, 0, 1, 1], [], []>} : vector<8x8xbf16>, vector<8x128xbf16>, vector<8x128xf32> -> vector<8x128xf32>
    %26 = arith.addf %22, %25 : vector<8x128xf32>
    %c0_15 = arith.constant 0 : index
    %c0_16 = arith.constant 0 : index
    %27 = vector.load %arg8[%c0_15, %c0_16] : memref<8x128xf32, #tpu.memory_space<vmem>>, vector<8x128xf32>
    tpu.vector_store %arg8[%c0_15, %c0_16], %26 {strides = array<i32>} : memref<8x128xf32, #tpu.memory_space<vmem>>, vector<8x128xf32>,
    %c0_17 = arith.constant 0 : index
    %c0_18 = arith.constant 0 : index
    %28 = vector.load %arg9[%c0_17, %c0_18] : memref<8x128xf32, #tpu.memory_space<vmem>>, vector<8x128xf32>
    %29 = arith.mulf %15, %20 : vector<8x8xf32>
    %30 = arith.truncf %29 : vector<8x8xf32> to vector<8x8xbf16>
    %cst_19 = arith.constant dense<0.000000e+00> : vector<8x128xf32>
    %31 = tpu.matmul %30, %21, %cst_19 {dimension_numbers = #tpu.dot_dimension_numbers<[1], [0], [0], [1], [0, 0, 1, 1], [], []>} : vector<8x8xbf16>, vector<8x128xbf16>, vector<8x128xf32> -> vector<8x128xf32>
    %32 = arith.addf %28, %31 : vector<8x128xf32>
    %c0_20 = arith.constant 0 : index
    %c0_21 = arith.constant 0 : index
    %33 = vector.load %arg9[%c0_20, %c0_21] : memref<8x128xf32, #tpu.memory_space<vmem>>, vector<8x128xf32>
    tpu.vector_store %arg9[%c0_20, %c0_21], %32 {strides = array<i32>} : memref<8x128xf32, #tpu.memory_space<vmem>>, vector<8x128xf32>,
    %c0_22 = arith.constant 0 : index
    %c0_23 = arith.constant 0 : index
    %34 = vector.load %arg10[%c0_22, %c0_23] : memref<8x128xf32, #tpu.memory_space<vmem>>, vector<8x128xf32>
    %35 = arith.mulf %17, %20 : vector<8x8xf32>
    %36 = arith.truncf %35 : vector<8x8xf32> to vector<8x8xbf16>
    %cst_24 = arith.constant dense<0.000000e+00> : vector<8x128xf32>
    %37 = tpu.matmul %36, %21, %cst_24 {dimension_numbers = #tpu.dot_dimension_numbers<[1], [0], [0], [1], [0, 0, 1, 1], [], []>} : vector<8x8xbf16>, vector<8x128xbf16>, vector<8x128xf32> -> vector<8x128xf32>
    %38 = arith.addf %34, %37 : vector<8x128xf32>
    %c0_25 = arith.constant 0 : index
    %c0_26 = arith.constant 0 : index
    %39 = vector.load %arg10[%c0_25, %c0_26] : memref<8x128xf32, #tpu.memory_space<vmem>>, vector<8x128xf32>
    tpu.vector_store %arg10[%c0_25, %c0_26], %38 {strides = array<i32>} : memref<8x128xf32, #tpu.memory_space<vmem>>, vector<8x128xf32>,
    %c0_i32_27 = arith.constant 0 : i32
    %40 = arith.cmpi eq, %arg1, %c0_i32_27 : i32
    %41 = arith.extui %40 : i1 to i32
    %c0_i32_28 = arith.constant 0 : i32
    %42 = arith.cmpi ne, %41, %c0_i32_28 : i32
    scf.if %42 {
      %c0_29 = arith.constant 0 : index
      %c0_30 = arith.constant 0 : index
      %43 = vector.load %arg8[%c0_29, %c0_30] : memref<8x128xf32, #tpu.memory_space<vmem>>, vector<8x128xf32>
      %44 = arith.truncf %43 : vector<8x128xf32> to vector<8x128xbf16>
      %c0_31 = arith.constant 0 : index
      %c0_32 = arith.constant 0 : index
      %45 = vector.load %arg7[%c0_31, %c0_32] : memref<8x384xbf16, #tpu.memory_space<vmem>>, vector<8x128xbf16>
      tpu.vector_store %arg7[%c0_31, %c0_32], %44 {strides = array<i32>} : memref<8x384xbf16, #tpu.memory_space<vmem>>, vector<8x128xbf16>,
      %c0_33 = arith.constant 0 : index
      %c0_34 = arith.constant 0 : index
      %46 = vector.load %arg9[%c0_33, %c0_34] : memref<8x128xf32, #tpu.memory_space<vmem>>, vector<8x128xf32>
      %47 = arith.truncf %46 : vector<8x128xf32> to vector<8x128xbf16>
      %c0_35 = arith.constant 0 : index
      %c128 = arith.constant 128 : index
      %48 = vector.load %arg7[%c0_35, %c128] : memref<8x384xbf16, #tpu.memory_space<vmem>>, vector<8x128xbf16>
      tpu.vector_store %arg7[%c0_35, %c128], %47 {strides = array<i32>} : memref<8x384xbf16, #tpu.memory_space<vmem>>, vector<8x128xbf16>,
      %c0_36 = arith.constant 0 : index
      %c0_37 = arith.constant 0 : index
      %49 = vector.load %arg10[%c0_36, %c0_37] : memref<8x128xf32, #tpu.memory_space<vmem>>, vector<8x128xf32>
      %50 = arith.truncf %49 : vector<8x128xf32> to vector<8x128xbf16>
      %c0_38 = arith.constant 0 : index
      %c256 = arith.constant 256 : index
      %51 = vector.load %arg7[%c0_38, %c256] : memref<8x384xbf16, #tpu.memory_space<vmem>>, vector<8x128xbf16>
      tpu.vector_store %arg7[%c0_38, %c256], %50 {strides = array<i32>} : memref<8x384xbf16, #tpu.memory_space<vmem>>, vector<8x128xbf16>,
    } else {
    }
    return
  }
  func.func @transform_0(%arg0: i32, %arg1: i32) -> (i32, i32) {
    %c0_i32 = arith.constant 0 : i32
    %c0_i32_0 = arith.constant 0 : i32
    return %arg0, %c0_i32 : i32, i32
  }
  func.func @transform_1(%arg0: i32, %arg1: i32) -> (i32, i32) {
    %c0_i32 = arith.constant 0 : i32
    %c0_i32_0 = arith.constant 0 : i32
    return %arg1, %c0_i32 : i32, i32
  }
  func.func @transform_2(%arg0: i32, %arg1: i32) -> (i32, i32) {
    %c0_i32 = arith.constant 0 : i32
    %c0_i32_0 = arith.constant 0 : i32
    return %arg1, %c0_i32 : i32, i32
  }
  func.func @transform_3(%arg0: i32, %arg1: i32) -> (i32, i32) {
    %c0_i32 = arith.constant 0 : i32
    %c0_i32_0 = arith.constant 0 : i32
    return %arg1, %c0_i32 : i32, i32
  }
  func.func @transform_4(%arg0: i32, %arg1: i32) -> (i32, i32) {
    %c0_i32 = arith.constant 0 : i32
    %c0_i32_0 = arith.constant 0 : i32
    return %arg1, %c0_i32 : i32, i32
  }
  func.func @transform_5(%arg0: i32, %arg1: i32) -> (i32, i32) {
    %c0_i32 = arith.constant 0 : i32
    %c0_i32_0 = arith.constant 0 : i32
    return %arg0, %c0_i32 : i32, i32
  }
}

</mosaic_0001>

<llo_original>
// kernel: attention_module_forward.3
$region0: #{attention_module_forward.3}
  #allocation0 [shape = 'u32[]', space=smem, size = 0x4, offset = 0x4, fixed_abs, tag = 'smem constant byte address 0x4 - core index']
  #allocation1 [shape = 'u32[144,128]{1,0:T(1,128)}', space=vmem, size = 0x12000, scoped, tag = 'internal scratch']
  #allocation2 [shape = 'f32[8,128]{1,0:T(8,128)}', space=vmem, size = 0x1000, scoped, tag = 'scratch operand']
  #allocation3 [shape = 'f32[8,128]{1,0:T(8,128)}', space=vmem, size = 0x1000, scoped, tag = 'scratch operand']
  #allocation4 [shape = 'f32[8,128]{1,0:T(8,128)}', space=vmem, size = 0x1000, scoped, tag = 'scratch operand']
  %s0 = inlined_call_operand.vmem [shape: bf16[8,128], index: 0, kind: input, shape index: {}]
  %s1 = inlined_call_operand.vmem [shape: bf16[8,128], index: 1, kind: input, shape index: {}]
  %s2 = inlined_call_operand.vmem [shape: bf16[8,128], index: 2, kind: input, shape index: {}]
  %s3 = inlined_call_operand.vmem [shape: bf16[8,128], index: 3, kind: input, shape index: {}]
  %s4 = inlined_call_operand.vmem [shape: bf16[8,128], index: 4, kind: input, shape index: {}]
  %s5 = inlined_call_operand.vmem [shape: bf16[8,384], index: 5, kind: output, shape index: {}]
  %s6 = sld [smem:[#allocation0]]
  $region38: #{attention_module_forward.3} parent=0
    _
  %s8 = ssub.s32 1, %s6
  %s9 = scalar_select 0, %s8, %s6
  // Predicated region
  $region2: #{attention_module_forward.3} parent=0 // pred_check
    _
  $region3: #{attention_module_forward.3} parent=0 // pred_check_branch
    %11 = sbr.rel (0) target = $region5
  $region4: #{attention_module_forward.3} parent=0 // pred_region
    _
  $region5: #{attention_module_forward.3} parent=0 // pred_fallthru
    _
  // Predicated region
  $region6: #{attention_module_forward.3} parent=0 // pred_check
    _
  $region7: #{attention_module_forward.3} parent=0 // pred_check_branch
    %13 = sbr.rel (0) target = $region9
  $region8: #{attention_module_forward.3} parent=0 // pred_region
    _
  $region9: #{attention_module_forward.3} parent=0 // pred_fallthru
    _
  // Predicated region
  $region10: #{attention_module_forward.3} parent=0 // pred_check
    _
  $region11: #{attention_module_forward.3} parent=0 // pred_check_branch
    %15 = sbr.rel (0) target = $region13
  $region12: #{attention_module_forward.3} parent=0 // pred_region
    _
  $region13: #{attention_module_forward.3} parent=0 // pred_fallthru
    _
  // Predicated region
  $region14: #{attention_module_forward.3} parent=0 // pred_check
    _
  $region15: #{attention_module_forward.3} parent=0 // pred_check_branch
    %17 = sbr.rel (0) target = $region17
  $region16: #{attention_module_forward.3} parent=0 // pred_region
    _
  $region17: #{attention_module_forward.3} parent=0 // pred_fallthru
    _
  // Predicated region
  $region18: #{attention_module_forward.3} parent=0 // pred_check
    _
  $region19: #{attention_module_forward.3} parent=0 // pred_check_branch
    %19 = sbr.rel (0) target = $region21
  $region20: #{attention_module_forward.3} parent=0 // pred_region
    _
  $region21: #{attention_module_forward.3} parent=0 // pred_fallthru
    _
  %p21 = scmp.eq.s32.totalorder 0, 0
  // Predicated region
  $region22: #{attention_module_forward.3} parent=0 // pred_check
    %p22 = pneg %p21
  $region23: #{attention_module_forward.3} parent=0 // pred_check_branch
    %24 = sbr.rel (%p22) target = $region25
  $region24: #{attention_module_forward.3} parent=0 // pred_region
    %25 = vst [vmem:[#allocation2] sm:$0xff] 0.0
    %26 = vst [vmem:[#allocation3] sm:$0xff] 0.0
    %27 = vst [vmem:[#allocation4] sm:$0xff] 0.0
  $region25: #{attention_module_forward.3} parent=0 // pred_fallthru
    _
  %v28 = vld [vmem:[%s0] sm:$0xf]
  %v29 = vld [vmem:[%s1] sm:$0xf]
  %30 = vmatprep.subr.bf16.mxu0 0
  %31 = vmatpush1.bf16.xpose.msra.mxu0 %v29
  %32 = vmatprep.subr.bf16.mxu0 0
  %33 = vmatpush1.bf16.xpose.msra.mxu0 0
  %34 = vmatprep.subr.bf16.mxu0 0
  %35 = vmatpush1.bf16.xpose.msra.mxu0 0
  %36 = vmatprep.subr.bf16.mxu0 0
  %37 = vmatpush1.bf16.xpose.msra.mxu0 0
  %38 = vmatprep.subr.bf16.mxu0 0
  %39 = vmatpush1.bf16.xpose.msra.mxu0 0
  %40 = vmatprep.subr.bf16.mxu0 0
  %41 = vmatpush1.bf16.xpose.msra.mxu0 0
  %42 = vmatprep.subr.bf16.mxu0 0
  %43 = vmatpush1.bf16.xpose.msra.mxu0 0
  %44 = vmatprep.subr.bf16.mxu0 0
  %45 = vmatpush1.bf16.xpose.msra.mxu0 0
  %46 = vmatprep.subr.bf16.mxu0 0
  %47 = vmatpush1.bf16.xpose.msra.mxu0 0
  %48 = vmatprep.subr.bf16.mxu0 0
  %49 = vmatpush1.bf16.xpose.msra.mxu0 0
  %50 = vmatprep.subr.bf16.mxu0 0
  %51 = vmatpush1.bf16.xpose.msra.mxu0 0
  %52 = vmatprep.subr.bf16.mxu0 0
  %53 = vmatpush1.bf16.xpose.msra.mxu0 0
  %54 = vmatprep.subr.bf16.mxu0 0
  %55 = vmatpush1.bf16.xpose.msra.mxu0 0
  %56 = vmatprep.subr.bf16.mxu0 0
  %57 = vmatpush1.bf16.xpose.msra.mxu0 0
  %58 = vmatprep.subr.bf16.mxu0 0
  %59 = vmatpush1.bf16.xpose.msra.mxu0 0
  %60 = vmatprep.subr.bf16.mxu0 0
  %61 = vmatpush1.bf16.xpose.msra.mxu0 0
  %62 = vmatprep.mubr.bf16.mxu0 0
  %63 = vmatmul.mubr.bf16.gmra.mrb[0].mxu0 %v28
  %v64 = vpop.f32.mrb[0].mxu0
  %v65 = vadd.f32 0.0, %v64
  %v66 = vpop.f32.mrb[0].mxu0
  %v67 = vpop.f32.mrb[0].mxu0
  %v68 = vpop.f32.mrb[0].mxu0
  %69 = vdwg.mxu0
  %v70 = vld [vmem:[%s2] sm:$0xf]
  %71 = vmatprep.subr.bf16.mxu0 0
  %72 = vmatpush1.bf16.xpose.msra.mxu0 %v70
  %73 = vmatprep.subr.bf16.mxu0 0
  %74 = vmatpush1.bf16.xpose.msra.mxu0 0
  %75 = vmatprep.subr.bf16.mxu0 0
  %76 = vmatpush1.bf16.xpose.msra.mxu0 0
  %77 = vmatprep.subr.bf16.mxu0 0
  %78 = vmatpush1.bf16.xpose.msra.mxu0 0
  %79 = vmatprep.subr.bf16.mxu0 0
  %80 = vmatpush1.bf16.xpose.msra.mxu0 0
  %81 = vmatprep.subr.bf16.mxu0 0
  %82 = vmatpush1.bf16.xpose.msra.mxu0 0
  %83 = vmatprep.subr.bf16.mxu0 0
  %84 = vmatpush1.bf16.xpose.msra.mxu0 0
  %85 = vmatprep.subr.bf16.mxu0 0
  %86 = vmatpush1.bf16.xpose.msra.mxu0 0
  %87 = vmatprep.subr.bf16.mxu0 0
  %88 = vmatpush1.bf16.xpose.msra.mxu0 0
  %89 = vmatprep.subr.bf16.mxu0 0
  %90 = vmatpush1.bf16.xpose.msra.mxu0 0
  %91 = vmatprep.subr.bf16.mxu0 0
  %92 = vmatpush1.bf16.xpose.msra.mxu0 0
  %93 = vmatprep.subr.bf16.mxu0 0
  %94 = vmatpush1.bf16.xpose.msra.mxu0 0
  %95 = vmatprep.subr.bf16.mxu0 0
  %96 = vmatpush1.bf16.xpose.msra.mxu0 0
  %97 = vmatprep.subr.bf16.mxu0 0
  %98 = vmatpush1.bf16.xpose.msra.mxu0 0
  %99 = vmatprep.subr.bf16.mxu0 0
  %100 = vmatpush1.bf16.xpose.msra.mxu0 0
  %101 = vmatprep.subr.bf16.mxu0 0
  %102 = vmatpush1.bf16.xpose.msra.mxu0 0
  %103 = vmatprep.mubr.bf16.mxu0 0
  %104 = vmatmul.mubr.bf16.gmra.mrb[0].mxu0 %v28
  %v105 = vpop.f32.mrb[0].mxu0
  %v106 = vadd.f32 0.0, %v105
  %v107 = vpop.f32.mrb[0].mxu0
  %v108 = vpop.f32.mrb[0].mxu0
  %v109 = vpop.f32.mrb[0].mxu0
  %110 = vdwg.mxu0
  %v111 = vld [vmem:[%s3] sm:$0xf]
  %112 = vmatprep.subr.bf16.mxu0 0
  %113 = vmatpush1.bf16.xpose.msra.mxu0 %v111
  %114 = vmatprep.subr.bf16.mxu0 0
  %115 = vmatpush1.bf16.xpose.msra.mxu0 0
  %116 = vmatprep.subr.bf16.mxu0 0
  %117 = vmatpush1.bf16.xpose.msra.mxu0 0
  %118 = vmatprep.subr.bf16.mxu0 0
  %119 = vmatpush1.bf16.xpose.msra.mxu0 0
  %120 = vmatprep.subr.bf16.mxu0 0
  %121 = vmatpush1.bf16.xpose.msra.mxu0 0
  %122 = vmatprep.subr.bf16.mxu0 0
  %123 = vmatpush1.bf16.xpose.msra.mxu0 0
  %124 = vmatprep.subr.bf16.mxu0 0
  %125 = vmatpush1.bf16.xpose.msra.mxu0 0
  %126 = vmatprep.subr.bf16.mxu0 0
  %127 = vmatpush1.bf16.xpose.msra.mxu0 0
  %128 = vmatprep.subr.bf16.mxu0 0
  %129 = vmatpush1.bf16.xpose.msra.mxu0 0
  %130 = vmatprep.subr.bf16.mxu0 0
  %131 = vmatpush1.bf16.xpose.msra.mxu0 0
  %132 = vmatprep.subr.bf16.mxu0 0
  %133 = vmatpush1.bf16.xpose.msra.mxu0 0
  %134 = vmatprep.subr.bf16.mxu0 0
  %135 = vmatpush1.bf16.xpose.msra.mxu0 0
  %136 = vmatprep.subr.bf16.mxu0 0
  %137 = vmatpush1.bf16.xpose.msra.mxu0 0
  %138 = vmatprep.subr.bf16.mxu0 0
  %139 = vmatpush1.bf16.xpose.msra.mxu0 0
  %140 = vmatprep.subr.bf16.mxu0 0
  %141 = vmatpush1.bf16.xpose.msra.mxu0 0
  %142 = vmatprep.subr.bf16.mxu0 0
  %143 = vmatpush1.bf16.xpose.msra.mxu0 0
  %144 = vmatprep.mubr.bf16.mxu0 0
  %145 = vmatmul.mubr.bf16.gmra.mrb[0].mxu0 %v28
  %v146 = vpop.f32.mrb[0].mxu0
  %v147 = vadd.f32 0.0, %v146
  %v148 = vpop.f32.mrb[0].mxu0
  %v149 = vpop.f32.mrb[0].mxu0
  %v150 = vpop.f32.mrb[0].mxu0
  %151 = vdwg.mxu0
  %v152 = vmax.f32 %v65, %v106
  %v153 = vmax.f32 %v152, %v147
  %v154 = vsub.f32 %v65, %v153
  %v155 = vmul.f32 %v154, 1.442695
  %v156 = vpow.pop %v155
  %v157 = vsub.f32 %v106, %v153
  %v158 = vmul.f32 %v157, 1.442695
  %v159 = vpow.pop %v158
  %v160 = vsub.f32 %v147, %v153
  %v161 = vmul.f32 %v160, 1.442695
  %v162 = vpow.pop %v161
  %v163 = vadd.f32 %v156, %v159
  %v164 = vadd.f32 %v163, %v162
  %v165 = vrcp.pop %v164
  %v166 = vld [vmem:[%s4] sm:$0xf]
  %v167 = vld [vmem:[#allocation2] sm:$0xff]
  %v168 = vmul.f32 %v156, %v165
  %v169 = vpack.c.bf16 %v168, %v168
  %vm170 = vcmask 64512
  %v172 = vsel %vm170, %v169, 0
  %vm174 = vcmask 1043456
  %v176 = vsel %vm174, %v166, 0
  %178 = vmatprep.subr.bf16.mxu0 0
  %179 = vmatpush1.bf16.msra.mxu0 %v176
  %180 = vmatprep.subr.bf16.mxu0 0
  %181 = vmatpush1.bf16.msra.mxu0 0
  %182 = vmatprep.subr.bf16.mxu0 0
  %183 = vmatpush1.bf16.msra.mxu0 0
  %184 = vmatprep.subr.bf16.mxu0 0
  %185 = vmatpush1.bf16.msra.mxu0 0
  %186 = vmatprep.subr.bf16.mxu0 0
  %187 = vmatpush1.bf16.msra.mxu0 0
  %188 = vmatprep.subr.bf16.mxu0 0
  %189 = vmatpush1.bf16.msra.mxu0 0
  %190 = vmatprep.subr.bf16.mxu0 0
  %191 = vmatpush1.bf16.msra.mxu0 0
  %192 = vmatprep.subr.bf16.mxu0 0
  %193 = vmatpush1.bf16.msra.mxu0 0
  %194 = vmatprep.subr.bf16.mxu0 0
  %195 = vmatpush1.bf16.msra.mxu0 0
  %196 = vmatprep.subr.bf16.mxu0 0
  %197 = vmatpush1.bf16.msra.mxu0 0
  %198 = vmatprep.subr.bf16.mxu0 0
  %199 = vmatpush1.bf16.msra.mxu0 0
  %200 = vmatprep.subr.bf16.mxu0 0
  %201 = vmatpush1.bf16.msra.mxu0 0
  %202 = vmatprep.subr.bf16.mxu0 0
  %203 = vmatpush1.bf16.msra.mxu0 0
  %204 = vmatprep.subr.bf16.mxu0 0
  %205 = vmatpush1.bf16.msra.mxu0 0
  %206 = vmatprep.subr.bf16.mxu0 0
  %207 = vmatpush1.bf16.msra.mxu0 0
  %208 = vmatprep.subr.bf16.mxu0 0
  %209 = vmatpush1.bf16.msra.mxu0 0
  %210 = vmatprep.mubr.bf16.mxu0 0
  %211 = vmatmul.mubr.bf16.gmra.mrb[0].mxu0 %v172
  %v212 = vpop.f32.mrb[0].mxu0
  %v213 = vadd.f32 0.0, %v212
  %v214 = vpop.f32.mrb[0].mxu0
  %v215 = vpop.f32.mrb[0].mxu0
  %v216 = vpop.f32.mrb[0].mxu0
  %217 = vdwg.mxu0
  %v218 = vadd.f32 %v167, %v213
  %219 = vst [vmem:[#allocation2] sm:$0xff] %v218
  %v220 = vld [vmem:[#allocation3] sm:$0xff]
  %v221 = vmul.f32 %v159, %v165
  %v222 = vpack.c.bf16 %v221, %v221
  %v224 = vsel %vm170, %v222, 0
  %226 = vmatprep.subr.bf16.mxu0 0
  %227 = vmatpush1.bf16.msra.mxu0 %v176
  %228 = vmatprep.subr.bf16.mxu0 0
  %229 = vmatpush1.bf16.msra.mxu0 0
  %230 = vmatprep.subr.bf16.mxu0 0
  %231 = vmatpush1.bf16.msra.mxu0 0
  %232 = vmatprep.subr.bf16.mxu0 0
  %233 = vmatpush1.bf16.msra.mxu0 0
  %234 = vmatprep.subr.bf16.mxu0 0
  %235 = vmatpush1.bf16.msra.mxu0 0
  %236 = vmatprep.subr.bf16.mxu0 0
  %237 = vmatpush1.bf16.msra.mxu0 0
  %238 = vmatprep.subr.bf16.mxu0 0
  %239 = vmatpush1.bf16.msra.mxu0 0
  %240 = vmatprep.subr.bf16.mxu0 0
  %241 = vmatpush1.bf16.msra.mxu0 0
  %242 = vmatprep.subr.bf16.mxu0 0
  %243 = vmatpush1.bf16.msra.mxu0 0
  %244 = vmatprep.subr.bf16.mxu0 0
  %245 = vmatpush1.bf16.msra.mxu0 0
  %246 = vmatprep.subr.bf16.mxu0 0
  %247 = vmatpush1.bf16.msra.mxu0 0
  %248 = vmatprep.subr.bf16.mxu0 0
  %249 = vmatpush1.bf16.msra.mxu0 0
  %250 = vmatprep.subr.bf16.mxu0 0
  %251 = vmatpush1.bf16.msra.mxu0 0
  %252 = vmatprep.subr.bf16.mxu0 0
  %253 = vmatpush1.bf16.msra.mxu0 0
  %254 = vmatprep.subr.bf16.mxu0 0
  %255 = vmatpush1.bf16.msra.mxu0 0
  %256 = vmatprep.subr.bf16.mxu0 0
  %257 = vmatpush1.bf16.msra.mxu0 0
  %258 = vmatprep.mubr.bf16.mxu0 0
  %259 = vmatmul.mubr.bf16.gmra.mrb[0].mxu0 %v224
  %v260 = vpop.f32.mrb[0].mxu0
  %v261 = vadd.f32 0.0, %v260
  %v262 = vpop.f32.mrb[0].mxu0
  %v263 = vpop.f32.mrb[0].mxu0
  %v264 = vpop.f32.mrb[0].mxu0
  %265 = vdwg.mxu0
  %v266 = vadd.f32 %v220, %v261
  %267 = vst [vmem:[#allocation3] sm:$0xff] %v266
  %v268 = vld [vmem:[#allocation4] sm:$0xff]
  %v269 = vmul.f32 %v162, %v165
  %v270 = vpack.c.bf16 %v269, %v269
  %v272 = vsel %vm170, %v270, 0
  %274 = vmatprep.subr.bf16.mxu0 0
  %275 = vmatpush1.bf16.msra.mxu0 %v176
  %276 = vmatprep.subr.bf16.mxu0 0
  %277 = vmatpush1.bf16.msra.mxu0 0
  %278 = vmatprep.subr.bf16.mxu0 0
  %279 = vmatpush1.bf16.msra.mxu0 0
  %280 = vmatprep.subr.bf16.mxu0 0
  %281 = vmatpush1.bf16.msra.mxu0 0
  %282 = vmatprep.subr.bf16.mxu0 0
  %283 = vmatpush1.bf16.msra.mxu0 0
  %284 = vmatprep.subr.bf16.mxu0 0
  %285 = vmatpush1.bf16.msra.mxu0 0
  %286 = vmatprep.subr.bf16.mxu0 0
  %287 = vmatpush1.bf16.msra.mxu0 0
  %288 = vmatprep.subr.bf16.mxu0 0
  %289 = vmatpush1.bf16.msra.mxu0 0
  %290 = vmatprep.subr.bf16.mxu0 0
  %291 = vmatpush1.bf16.msra.mxu0 0
  %292 = vmatprep.subr.bf16.mxu0 0
  %293 = vmatpush1.bf16.msra.mxu0 0
  %294 = vmatprep.subr.bf16.mxu0 0
  %295 = vmatpush1.bf16.msra.mxu0 0
  %296 = vmatprep.subr.bf16.mxu0 0
  %297 = vmatpush1.bf16.msra.mxu0 0
  %298 = vmatprep.subr.bf16.mxu0 0
  %299 = vmatpush1.bf16.msra.mxu0 0
  %300 = vmatprep.subr.bf16.mxu0 0
  %301 = vmatpush1.bf16.msra.mxu0 0
  %302 = vmatprep.subr.bf16.mxu0 0
  %303 = vmatpush1.bf16.msra.mxu0 0
  %304 = vmatprep.subr.bf16.mxu0 0
  %305 = vmatpush1.bf16.msra.mxu0 0
  %306 = vmatprep.mubr.bf16.mxu0 0
  %307 = vmatmul.mubr.bf16.gmra.mrb[0].mxu0 %v272
  %v308 = vpop.f32.mrb[0].mxu0
  %v309 = vadd.f32 0.0, %v308
  %v310 = vpop.f32.mrb[0].mxu0
  %v311 = vpop.f32.mrb[0].mxu0
  %v312 = vpop.f32.mrb[0].mxu0
  %313 = vdwg.mxu0
  %v314 = vadd.f32 %v268, %v309
  %315 = vst [vmem:[#allocation4] sm:$0xff] %v314
  // Predicated region
  $region26: #{attention_module_forward.3} parent=0 // pred_check
    %p316 = pneg %p21
  $region27: #{attention_module_forward.3} parent=0 // pred_check_branch
    %318 = sbr.rel (%p316) target = $region29
  $region28: #{attention_module_forward.3} parent=0 // pred_region
    %v319 = vld [vmem:[#allocation2] sm:$0xff]
    %v320 = vpack.c.bf16 %v319, %v319
    %321 = vst [vmem:[%s5] sm:$0xf] %v320
    %v322 = vld [vmem:[#allocation3] sm:$0xff]
    %v323 = vpack.c.bf16 %v322, %v322
    %324 = vst [vmem:[%s5 + $0x4] sm:$0xf] %v323
    %v325 = vld [vmem:[#allocation4] sm:$0xff]
    %v326 = vpack.c.bf16 %v325, %v325
    %327 = vst [vmem:[%s5 + $0x8] sm:$0xf] %v326
  $region29: #{attention_module_forward.3} parent=0 // pred_fallthru
    _
  // Predicated region
  $region30: #{attention_module_forward.3} parent=0 // pred_check
    _
  $region31: #{attention_module_forward.3} parent=0 // pred_check_branch
    %329 = sbr.rel (0) target = $region33
  $region32: #{attention_module_forward.3} parent=0 // pred_region
    _
  $region33: #{attention_module_forward.3} parent=0 // pred_fallthru
    _
  // Predicated region
  $region34: #{attention_module_forward.3} parent=0 // pred_check
    _
  $region35: #{attention_module_forward.3} parent=0 // pred_check_branch
    %331 = sbr.rel (0) target = $region37
  $region36: #{attention_module_forward.3} parent=0 // pred_region
    _
  $region37: #{attention_module_forward.3} parent=0 // pred_fallthru
    _

// kernel: attention_module_forward.2
$region0: #{attention_module_forward.2}
  #allocation0 [shape = 'u32[]', space=smem, size = 0x4, offset = 0x4, fixed_abs, tag = 'smem constant byte address 0x4 - core index']
  #allocation1 [shape = 'u32[144,128]{1,0:T(1,128)}', space=vmem, size = 0x12000, scoped, tag = 'internal scratch']
  %s0 = inlined_call_operand.vmem [shape: bf16[8,128], index: 0, kind: input, shape index: {}]
  %s1 = inlined_call_operand.vmem [shape: bf16[8,128], index: 1, kind: input, shape index: {}]
  %s2 = inlined_call_operand.vmem [shape: bf16[8,128], index: 2, kind: input, shape index: {}]
  %s3 = inlined_call_operand.vmem [shape: bf16[128,128], index: 3, kind: input, shape index: {}]
  %s4 = inlined_call_operand.vmem [shape: f32[1,128], index: 4, kind: input, shape index: {}]
  %s5 = inlined_call_operand.hbm [shape: bf16[128,128], index: 5, kind: input, shape index: {}]
  %s6 = inlined_call_operand.hbm [shape: f32[1,128], index: 6, kind: input, shape index: {}]
  %s7 = inlined_call_operand.hbm [shape: bf16[128,128], index: 7, kind: input, shape index: {}]
  %s8 = inlined_call_operand.hbm [shape: f32[1,128], index: 8, kind: input, shape index: {}]
  %s9 = inlined_call_operand.vmem [shape: bf16[8,128], index: 9, kind: output, shape index: {0}]
  %s10 = inlined_call_operand.vmem [shape: bf16[8,128], index: 10, kind: output, shape index: {1}]
  %s11 = inlined_call_operand.vmem [shape: bf16[8,128], index: 11, kind: output, shape index: {2}]
  %s12 = inlined_call_operand.vmem [shape: bf16[8,128], index: 12, kind: output, shape index: {3}]
  %s13 = inlined_call_operand.vmem [shape: bf16[8,128], index: 13, kind: output, shape index: {4}]
  %14 = xla_tuple %s9, %s10, %s11, %s12, %s13
  %s15 = sld [smem:[#allocation0]]
  $region94: #{attention_module_forward.2} parent=0
    _
  %s17 = ssub.s32 1, %s15
  %s18 = scalar_select 0, %s17, %s15
  $region1: #{attention_module_forward.2} parent=0
    #allocation2 [shape = 'u8[32768]{0}', space=vmem, size = 0x8000, scoped, tag = 'input window, operand 5, single buffered']
    #allocation3 [shape = 's32[1]{0}', space=sflag, size = 0x4, scoped, tag = 'scoped memory for attention_module_forward.2']
    #allocation4 [shape = 'u8[512]{0}', space=vmem, size = 0x400, scoped, tag = 'input window, operand 6, single buffered']
    #allocation5 [shape = 's32[1]{0}', space=sflag, size = 0x4, scoped, tag = 'scoped memory for attention_module_forward.2']
    #allocation6 [shape = 'u8[32768]{0}', space=vmem, size = 0x8000, scoped, tag = 'input window, operand 7, single buffered']
    #allocation7 [shape = 'u8[512]{0}', space=vmem, size = 0x400, scoped, tag = 'input window, operand 8, single buffered']
    #allocation8 [shape = 's32[1]{0}', space=sflag, size = 0x4, scoped, tag = 'scoped memory for attention_module_forward.2']
    %19 = vsyncpa [#allocation3], 0
    %20 = vsyncpa [#allocation5], 0
    %21 = vsyncpa [#allocation8], 0
    // Predicated region
    $region2: #{attention_module_forward.2} parent=1 // pred_check
      _
    $region3: #{attention_module_forward.2} parent=1 // pred_check_branch
      %23 = sbr.rel (0) target = $region5
    $region4: #{attention_module_forward.2} parent=1 // pred_region
      _
    $region5: #{attention_module_forward.2} parent=1 // pred_fallthru
      _
    // Predicated region
    $region6: #{attention_module_forward.2} parent=1 // pred_check
      _
    $region7: #{attention_module_forward.2} parent=1 // pred_check_branch
      %25 = sbr.rel (0) target = $region9
    $region8: #{attention_module_forward.2} parent=1 // pred_region
      _
    $region9: #{attention_module_forward.2} parent=1 // pred_fallthru
      _
    // Predicated region
    $region10: #{attention_module_forward.2} parent=1 // pred_check
      _
    $region11: #{attention_module_forward.2} parent=1 // pred_check_branch
      %27 = sbr.rel (0) target = $region13
    $region12: #{attention_module_forward.2} parent=1 // pred_region
      _
    $region13: #{attention_module_forward.2} parent=1 // pred_fallthru
      _
    // Predicated region
    $region14: #{attention_module_forward.2} parent=1 // pred_check
      _
    $region15: #{attention_module_forward.2} parent=1 // pred_check_branch
      %29 = sbr.rel (0) target = $region17
    $region16: #{attention_module_forward.2} parent=1 // pred_region
      _
    $region17: #{attention_module_forward.2} parent=1 // pred_fallthru
      _
    // Predicated region
    $region18: #{attention_module_forward.2} parent=1 // pred_check
      _
    $region19: #{attention_module_forward.2} parent=1 // pred_check_branch
      %31 = sbr.rel (0) target = $region21
    $region20: #{attention_module_forward.2} parent=1 // pred_region
      _
    $region21: #{attention_module_forward.2} parent=1 // pred_fallthru
      _
    // Predicated region
    $region22: #{attention_module_forward.2} parent=1 // pred_check
      _
    $region23: #{attention_module_forward.2} parent=1 // pred_check_branch
      %33 = sbr.rel (0) target = $region25
    $region24: #{attention_module_forward.2} parent=1 // pred_region
      %s35 = ssub.s32 1024, 1024
      %36 = vsyncadd [#allocation3], %s35
      %s37 = sshll.u32 [#allocation2], 4
      %s38 = int_to_ptr.vmem [resolvable:$true] %s37
      %43 = dma.hbm_to_vmem [thread:$0]  %s5, 1024, %s38, [#allocation3], 64, 64, 4
    $region25: #{attention_module_forward.2} parent=1 // pred_fallthru
      _
    // Predicated region
    $region26: #{attention_module_forward.2} parent=1 // pred_check
      _
    $region27: #{attention_module_forward.2} parent=1 // pred_check_branch
      %45 = sbr.rel (0) target = $region29
    $region28: #{attention_module_forward.2} parent=1 // pred_region
      %s47 = ssub.s32 16, 16
      %48 = vsyncadd [#allocation5], %s47
      %s50 = sshll.u32 [#allocation4], 4
      %s51 = int_to_ptr.vmem [resolvable:$true] %s50
      %53 = dma.hbm_to_vmem [thread:$0]  %s6, 16, %s51, [#allocation5]
    $region29: #{attention_module_forward.2} parent=1 // pred_fallthru
      _
    // Predicated region
    $region30: #{attention_module_forward.2} parent=1 // pred_check
      _
    $region31: #{attention_module_forward.2} parent=1 // pred_check_branch
      %55 = sbr.rel (0) target = $region33
    $region32: #{attention_module_forward.2} parent=1 // pred_region
      %s57 = ssub.s32 1024, 1024
      %58 = vsyncadd [#allocation5], %s57
      %s59 = sshll.u32 [#allocation6], 4
      %s60 = int_to_ptr.vmem [resolvable:$true] %s59
      %65 = dma.hbm_to_vmem [thread:$0]  %s7, 1024, %s60, [#allocation5], 64, 64, 4
    $region33: #{attention_module_forward.2} parent=1 // pred_fallthru
      _
    // Predicated region
    $region34: #{attention_module_forward.2} parent=1 // pred_check
      _
    $region35: #{attention_module_forward.2} parent=1 // pred_check_branch
      %67 = sbr.rel (0) target = $region37
    $region36: #{attention_module_forward.2} parent=1 // pred_region
      %s69 = ssub.s32 16, 16
      %70 = vsyncadd [#allocation8], %s69
      %s72 = sshll.u32 [#allocation7], 4
      %s73 = int_to_ptr.vmem [resolvable:$true] %s72
      %75 = dma.hbm_to_vmem [thread:$0]  %s8, 16, %s73, [#allocation8]
    $region37: #{attention_module_forward.2} parent=1 // pred_fallthru
      _
    // Predicated region
    $region38: #{attention_module_forward.2} parent=1 // pred_check
      _
    $region39: #{attention_module_forward.2} parent=1 // pred_check_branch
      %77 = sbr.rel (0) target = $region41
    $region40: #{attention_module_forward.2} parent=1 // pred_region
      %78 = dma.done [#allocation3], 1024
    $region41: #{attention_module_forward.2} parent=1 // pred_fallthru
      _
    // Predicated region
    $region42: #{attention_module_forward.2} parent=1 // pred_check
      _
    $region43: #{attention_module_forward.2} parent=1 // pred_check_branch
      %80 = sbr.rel (0) target = $region45
    $region44: #{attention_module_forward.2} parent=1 // pred_region
      %81 = dma.done [#allocation5], 16
    $region45: #{attention_module_forward.2} parent=1 // pred_fallthru
      _
    // Predicated region
    $region46: #{attention_module_forward.2} parent=1 // pred_check
      _
    $region47: #{attention_module_forward.2} parent=1 // pred_check_branch
      %83 = sbr.rel (0) target = $region49
    $region48: #{attention_module_forward.2} parent=1 // pred_region
      %84 = dma.done [#allocation5], 1024
    $region49: #{attention_module_forward.2} parent=1 // pred_fallthru
      _
    // Predicated region
    $region50: #{attention_module_forward.2} parent=1 // pred_check
      _
    $region51: #{attention_module_forward.2} parent=1 // pred_check_branch
      %86 = sbr.rel (0) target = $region53
    $region52: #{attention_module_forward.2} parent=1 // pred_region
      %87 = dma.done [#allocation8], 16
    $region53: #{attention_module_forward.2} parent=1 // pred_fallthru
      _
    %v89 = vld [vmem:[%s0] sm:$0xf]
    %v90 = vld [vmem:[%s1] sm:$0xf]
    %v91 = vld [vmem:[%s2] sm:$0xf]
    %v92 = vld [vmem:[#allocation2] sm:$0xf]
    %v93 = vld [vmem:[#allocation2 + $0x4] sm:$0xf]
    %v94 = vld [vmem:[#allocation2 + $0x8] sm:$0xf]
    %v95 = vld [vmem:[#allocation2 + $0xc] sm:$0xf]
    %v96 = vld [vmem:[#allocation2 + $0x10] sm:$0xf]
    %v97 = vld [vmem:[#allocation2 + $0x14] sm:$0xf]
    %v98 = vld [vmem:[#allocation2 + $0x18] sm:$0xf]
    %v99 = vld [vmem:[#allocation2 + $0x1c] sm:$0xf]
    %v100 = vld [vmem:[#allocation2 + $0x20] sm:$0xf]
    %v101 = vld [vmem:[#allocation2 + $0x24] sm:$0xf]
    %v102 = vld [vmem:[#allocation2 + $0x28] sm:$0xf]
    %v103 = vld [vmem:[#allocation2 + $0x2c] sm:$0xf]
    %v104 = vld [vmem:[#allocation2 + $0x30] sm:$0xf]
    %v105 = vld [vmem:[#allocation2 + $0x34] sm:$0xf]
    %v106 = vld [vmem:[#allocation2 + $0x38] sm:$0xf]
    %v107 = vld [vmem:[#allocation2 + $0x3c] sm:$0xf]
    %v108 = vld [vmem:[#allocation4] sm:$0x1]
    %v109 = vld [vmem:[%s3] sm:$0xf]
    %v110 = vld [vmem:[%s3 + $0x4] sm:$0xf]
    %v111 = vld [vmem:[%s3 + $0x8] sm:$0xf]
    %v112 = vld [vmem:[%s3 + $0xc] sm:$0xf]
    %v113 = vld [vmem:[%s3 + $0x10] sm:$0xf]
    %v114 = vld [vmem:[%s3 + $0x14] sm:$0xf]
    %v115 = vld [vmem:[%s3 + $0x18] sm:$0xf]
    %v116 = vld [vmem:[%s3 + $0x1c] sm:$0xf]
    %v117 = vld [vmem:[%s3 + $0x20] sm:$0xf]
    %v118 = vld [vmem:[%s3 + $0x24] sm:$0xf]
    %v119 = vld [vmem:[%s3 + $0x28] sm:$0xf]
    %v120 = vld [vmem:[%s3 + $0x2c] sm:$0xf]
    %v121 = vld [vmem:[%s3 + $0x30] sm:$0xf]
    %v122 = vld [vmem:[%s3 + $0x34] sm:$0xf]
    %v123 = vld [vmem:[%s3 + $0x38] sm:$0xf]
    %v124 = vld [vmem:[%s3 + $0x3c] sm:$0xf]
    %v125 = vld [vmem:[%s4] sm:$0x1]
    %v127 = vlaneseq
    %v128 = vshrl.u32 %v127, 7
    %v129 = vsub.s32 0, %v128
    %v130 = vrot.slane %v125, %v129
    %v148 = vunpack.c.l.b16 %v109
    %v149 = vunpack.c.l.b16 %v110
    %v150 = vunpack.c.l.b16 %v111
    %v151 = vunpack.c.l.b16 %v112
    %v152 = vunpack.c.l.b16 %v113
    %v153 = vunpack.c.l.b16 %v114
    %v154 = vunpack.c.l.b16 %v115
    %v155 = vunpack.c.l.b16 %v116
    %v156 = vunpack.c.l.b16 %v117
    %v157 = vunpack.c.l.b16 %v118
    %v158 = vunpack.c.l.b16 %v119
    %v159 = vunpack.c.l.b16 %v120
    %v160 = vunpack.c.l.b16 %v121
    %v161 = vunpack.c.l.b16 %v122
    %v162 = vunpack.c.l.b16 %v123
    %v163 = vunpack.c.l.b16 %v124
    %v164 = vpack.c.b16 %v149, %v148
    %v165 = vpack.c.b16 %v151, %v150
    %v166 = vpack.c.b16 %v153, %v152
    %v167 = vpack.c.b16 %v155, %v154
    %v168 = vpack.c.b16 %v157, %v156
    %v169 = vpack.c.b16 %v159, %v158
    %v170 = vpack.c.b16 %v161, %v160
    %v171 = vpack.c.b16 %v163, %v162
    %180 = vmatprep.subr.bf16.mxu0 0
    %181 = vmatpush1.bf16.msra.mxu0 %v164
    %182 = vmatprep.subr.bf16.mxu0 0
    %183 = vmatpush1.bf16.msra.mxu0 %v165
    %184 = vmatprep.subr.bf16.mxu0 0
    %185 = vmatpush1.bf16.msra.mxu0 %v166
    %186 = vmatprep.subr.bf16.mxu0 0
    %187 = vmatpush1.bf16.msra.mxu0 %v167
    %188 = vmatprep.subr.bf16.mxu0 0
    %189 = vmatpush1.bf16.msra.mxu0 %v168
    %190 = vmatprep.subr.bf16.mxu0 0
    %191 = vmatpush1.bf16.msra.mxu0 %v169
    %192 = vmatprep.subr.bf16.mxu0 0
    %193 = vmatpush1.bf16.msra.mxu0 %v170
    %194 = vmatprep.subr.bf16.mxu0 0
    %195 = vmatpush1.bf16.msra.mxu0 %v171
    %196 = vmatprep.subr.bf16.mxu0 0
    %197 = vmatpush1.bf16.msra.mxu0 0
    %198 = vmatprep.subr.bf16.mxu0 0
    %199 = vmatpush1.bf16.msra.mxu0 0
    %200 = vmatprep.subr.bf16.mxu0 0
    %201 = vmatpush1.bf16.msra.mxu0 0
    %202 = vmatprep.subr.bf16.mxu0 0
    %203 = vmatpush1.bf16.msra.mxu0 0
    %204 = vmatprep.subr.bf16.mxu0 0
    %205 = vmatpush1.bf16.msra.mxu0 0
    %206 = vmatprep.subr.bf16.mxu0 0
    %207 = vmatpush1.bf16.msra.mxu0 0
    %208 = vmatprep.subr.bf16.mxu0 0
    %209 = vmatpush1.bf16.msra.mxu0 0
    %210 = vmatprep.subr.bf16.mxu0 0
    %211 = vmatpush1.bf16.msra.mxu0 0
    %212 = vmatprep.mubr.bf16.mxu0 0
    %213 = vmatmul.mubr.bf16.gmra.mrb[0].mxu0 %v89
    %v214 = vpop.f32.mrb[0].mxu0
    %v215 = vadd.f32 %v130, %v214
    %v216 = vpop.f32.mrb[0].mxu0
    %v217 = vpop.f32.mrb[0].mxu0
    %v218 = vpop.f32.mrb[0].mxu0
    %219 = vdwg.mxu0
    %v221 = vlaneseq
    %v222 = vshrl.u32 %v221, 7
    %v223 = vsub.s32 0, %v222
    %v224 = vrot.slane %v108, %v223
    %v242 = vunpack.c.l.b16 %v92
    %v243 = vunpack.c.l.b16 %v93
    %v244 = vunpack.c.l.b16 %v94
    %v245 = vunpack.c.l.b16 %v95
    %v246 = vunpack.c.l.b16 %v96
    %v247 = vunpack.c.l.b16 %v97
    %v248 = vunpack.c.l.b16 %v98
    %v249 = vunpack.c.l.b16 %v99
    %v250 = vunpack.c.l.b16 %v100
    %v251 = vunpack.c.l.b16 %v101
    %v252 = vunpack.c.l.b16 %v102
    %v253 = vunpack.c.l.b16 %v103
    %v254 = vunpack.c.l.b16 %v104
    %v255 = vunpack.c.l.b16 %v105
    %v256 = vunpack.c.l.b16 %v106
    %v257 = vunpack.c.l.b16 %v107
    %v258 = vpack.c.b16 %v243, %v242
    %v259 = vpack.c.b16 %v245, %v244
    %v260 = vpack.c.b16 %v247, %v246
    %v261 = vpack.c.b16 %v249, %v248
    %v262 = vpack.c.b16 %v251, %v250
    %v263 = vpack.c.b16 %v253, %v252
    %v264 = vpack.c.b16 %v255, %v254
    %v265 = vpack.c.b16 %v257, %v256
    %274 = vmatprep.subr.bf16.mxu0 0
    %275 = vmatpush1.bf16.msra.mxu0 %v258
    %276 = vmatprep.subr.bf16.mxu0 0
    %277 = vmatpush1.bf16.msra.mxu0 %v259
    %278 = vmatprep.subr.bf16.mxu0 0
    %279 = vmatpush1.bf16.msra.mxu0 %v260
    %280 = vmatprep.subr.bf16.mxu0 0
    %281 = vmatpush1.bf16.msra.mxu0 %v261
    %282 = vmatprep.subr.bf16.mxu0 0
    %283 = vmatpush1.bf16.msra.mxu0 %v262
    %284 = vmatprep.subr.bf16.mxu0 0
    %285 = vmatpush1.bf16.msra.mxu0 %v263
    %286 = vmatprep.subr.bf16.mxu0 0
    %287 = vmatpush1.bf16.msra.mxu0 %v264
    %288 = vmatprep.subr.bf16.mxu0 0
    %289 = vmatpush1.bf16.msra.mxu0 %v265
    %290 = vmatprep.subr.bf16.mxu0 0
    %291 = vmatpush1.bf16.msra.mxu0 0
    %292 = vmatprep.subr.bf16.mxu0 0
    %293 = vmatpush1.bf16.msra.mxu0 0
    %294 = vmatprep.subr.bf16.mxu0 0
    %295 = vmatpush1.bf16.msra.mxu0 0
    %296 = vmatprep.subr.bf16.mxu0 0
    %297 = vmatpush1.bf16.msra.mxu0 0
    %298 = vmatprep.subr.bf16.mxu0 0
    %299 = vmatpush1.bf16.msra.mxu0 0
    %300 = vmatprep.subr.bf16.mxu0 0
    %301 = vmatpush1.bf16.msra.mxu0 0
    %302 = vmatprep.subr.bf16.mxu0 0
    %303 = vmatpush1.bf16.msra.mxu0 0
    %304 = vmatprep.subr.bf16.mxu0 0
    %305 = vmatpush1.bf16.msra.mxu0 0
    %306 = vmatprep.mubr.bf16.mxu0 0
    %307 = vmatmul.mubr.bf16.gmra.mrb[0].mxu0 %v89
    %v308 = vpop.f32.mrb[0].mxu0
    %v309 = vadd.f32 %v224, %v308
    %v310 = vpop.f32.mrb[0].mxu0
    %v311 = vpop.f32.mrb[0].mxu0
    %v312 = vpop.f32.mrb[0].mxu0
    %313 = vdwg.mxu0
    %314 = vmatprep.subr.bf16.mxu0 0
    %315 = vmatpush1.bf16.msra.mxu0 %v258
    %316 = vmatprep.subr.bf16.mxu0 0
    %317 = vmatpush1.bf16.msra.mxu0 %v259
    %318 = vmatprep.subr.bf16.mxu0 0
    %319 = vmatpush1.bf16.msra.mxu0 %v260
    %320 = vmatprep.subr.bf16.mxu0 0
    %321 = vmatpush1.bf16.msra.mxu0 %v261
    %322 = vmatprep.subr.bf16.mxu0 0
    %323 = vmatpush1.bf16.msra.mxu0 %v262
    %324 = vmatprep.subr.bf16.mxu0 0
    %325 = vmatpush1.bf16.msra.mxu0 %v263
    %326 = vmatprep.subr.bf16.mxu0 0
    %327 = vmatpush1.bf16.msra.mxu0 %v264
    %328 = vmatprep.subr.bf16.mxu0 0
    %329 = vmatpush1.bf16.msra.mxu0 %v265
    %330 = vmatprep.subr.bf16.mxu0 0
    %331 = vmatpush1.bf16.msra.mxu0 0
    %332 = vmatprep.subr.bf16.mxu0 0
    %333 = vmatpush1.bf16.msra.mxu0 0
    %334 = vmatprep.subr.bf16.mxu0 0
    %335 = vmatpush1.bf16.msra.mxu0 0
    %336 = vmatprep.subr.bf16.mxu0 0
    %337 = vmatpush1.bf16.msra.mxu0 0
    %338 = vmatprep.subr.bf16.mxu0 0
    %339 = vmatpush1.bf16.msra.mxu0 0
    %340 = vmatprep.subr.bf16.mxu0 0
    %341 = vmatpush1.bf16.msra.mxu0 0
    %342 = vmatprep.subr.bf16.mxu0 0
    %343 = vmatpush1.bf16.msra.mxu0 0
    %344 = vmatprep.subr.bf16.mxu0 0
    %345 = vmatpush1.bf16.msra.mxu0 0
    %346 = vmatprep.mubr.bf16.mxu0 0
    %347 = vmatmul.mubr.bf16.gmra.mrb[0].mxu0 %v90
    %v348 = vpop.f32.mrb[0].mxu0
    %v349 = vadd.f32 %v224, %v348
    %v350 = vpop.f32.mrb[0].mxu0
    %v351 = vpop.f32.mrb[0].mxu0
    %v352 = vpop.f32.mrb[0].mxu0
    %353 = vdwg.mxu0
    %354 = vmatprep.subr.bf16.mxu0 0
    %355 = vmatpush1.bf16.msra.mxu0 %v258
    %356 = vmatprep.subr.bf16.mxu0 0
    %357 = vmatpush1.bf16.msra.mxu0 %v259
    %358 = vmatprep.subr.bf16.mxu0 0
    %359 = vmatpush1.bf16.msra.mxu0 %v260
    %360 = vmatprep.subr.bf16.mxu0 0
    %361 = vmatpush1.bf16.msra.mxu0 %v261
    %362 = vmatprep.subr.bf16.mxu0 0
    %363 = vmatpush1.bf16.msra.mxu0 %v262
    %364 = vmatprep.subr.bf16.mxu0 0
    %365 = vmatpush1.bf16.msra.mxu0 %v263
    %366 = vmatprep.subr.bf16.mxu0 0
    %367 = vmatpush1.bf16.msra.mxu0 %v264
    %368 = vmatprep.subr.bf16.mxu0 0
    %369 = vmatpush1.bf16.msra.mxu0 %v265
    %370 = vmatprep.subr.bf16.mxu0 0
    %371 = vmatpush1.bf16.msra.mxu0 0
    %372 = vmatprep.subr.bf16.mxu0 0
    %373 = vmatpush1.bf16.msra.mxu0 0
    %374 = vmatprep.subr.bf16.mxu0 0
    %375 = vmatpush1.bf16.msra.mxu0 0
    %376 = vmatprep.subr.bf16.mxu0 0
    %377 = vmatpush1.bf16.msra.mxu0 0
    %378 = vmatprep.subr.bf16.mxu0 0
    %379 = vmatpush1.bf16.msra.mxu0 0
    %380 = vmatprep.subr.bf16.mxu0 0
    %381 = vmatpush1.bf16.msra.mxu0 0
    %382 = vmatprep.subr.bf16.mxu0 0
    %383 = vmatpush1.bf16.msra.mxu0 0
    %384 = vmatprep.subr.bf16.mxu0 0
    %385 = vmatpush1.bf16.msra.mxu0 0
    %386 = vmatprep.mubr.bf16.mxu0 0
    %387 = vmatmul.mubr.bf16.gmra.mrb[0].mxu0 %v91
    %v388 = vpop.f32.mrb[0].mxu0
    %v389 = vadd.f32 %v224, %v388
    %v390 = vpop.f32.mrb[0].mxu0
    %v391 = vpop.f32.mrb[0].mxu0
    %v392 = vpop.f32.mrb[0].mxu0
    %393 = vdwg.mxu0
    %v394 = vld [vmem:[#allocation6] sm:$0xf]
    %v395 = vld [vmem:[#allocation6 + $0x4] sm:$0xf]
    %v396 = vld [vmem:[#allocation6 + $0x8] sm:$0xf]
    %v397 = vld [vmem:[#allocation6 + $0xc] sm:$0xf]
    %v398 = vld [vmem:[#allocation6 + $0x10] sm:$0xf]
    %v399 = vld [vmem:[#allocation6 + $0x14] sm:$0xf]
    %v400 = vld [vmem:[#allocation6 + $0x18] sm:$0xf]
    %v401 = vld [vmem:[#allocation6 + $0x1c] sm:$0xf]
    %v402 = vld [vmem:[#allocation6 + $0x20] sm:$0xf]
    %v403 = vld [vmem:[#allocation6 + $0x24] sm:$0xf]
    %v404 = vld [vmem:[#allocation6 + $0x28] sm:$0xf]
    %v405 = vld [vmem:[#allocation6 + $0x2c] sm:$0xf]
    %v406 = vld [vmem:[#allocation6 + $0x30] sm:$0xf]
    %v407 = vld [vmem:[#allocation6 + $0x34] sm:$0xf]
    %v408 = vld [vmem:[#allocation6 + $0x38] sm:$0xf]
    %v409 = vld [vmem:[#allocation6 + $0x3c] sm:$0xf]
    %v410 = vld [vmem:[#allocation7] sm:$0x1]
    %v412 = vlaneseq
    %v413 = vshrl.u32 %v412, 7
    %v414 = vsub.s32 0, %v413
    %v415 = vrot.slane %v410, %v414
    %v433 = vunpack.c.l.b16 %v394
    %v434 = vunpack.c.l.b16 %v395
    %v435 = vunpack.c.l.b16 %v396
    %v436 = vunpack.c.l.b16 %v397
    %v437 = vunpack.c.l.b16 %v398
    %v438 = vunpack.c.l.b16 %v399
    %v439 = vunpack.c.l.b16 %v400
    %v440 = vunpack.c.l.b16 %v401
    %v441 = vunpack.c.l.b16 %v402
    %v442 = vunpack.c.l.b16 %v403
    %v443 = vunpack.c.l.b16 %v404
    %v444 = vunpack.c.l.b16 %v405
    %v445 = vunpack.c.l.b16 %v406
    %v446 = vunpack.c.l.b16 %v407
    %v447 = vunpack.c.l.b16 %v408
    %v448 = vunpack.c.l.b16 %v409
    %v449 = vpack.c.b16 %v434, %v433
    %v450 = vpack.c.b16 %v436, %v435
    %v451 = vpack.c.b16 %v438, %v437
    %v452 = vpack.c.b16 %v440, %v439
    %v453 = vpack.c.b16 %v442, %v441
    %v454 = vpack.c.b16 %v444, %v443
    %v455 = vpack.c.b16 %v446, %v445
    %v456 = vpack.c.b16 %v448, %v447
    %465 = vmatprep.subr.bf16.mxu0 0
    %466 = vmatpush1.bf16.msra.mxu0 %v449
    %467 = vmatprep.subr.bf16.mxu0 0
    %468 = vmatpush1.bf16.msra.mxu0 %v450
    %469 = vmatprep.subr.bf16.mxu0 0
    %470 = vmatpush1.bf16.msra.mxu0 %v451
    %471 = vmatprep.subr.bf16.mxu0 0
    %472 = vmatpush1.bf16.msra.mxu0 %v452
    %473 = vmatprep.subr.bf16.mxu0 0
    %474 = vmatpush1.bf16.msra.mxu0 %v453
    %475 = vmatprep.subr.bf16.mxu0 0
    %476 = vmatpush1.bf16.msra.mxu0 %v454
    %477 = vmatprep.subr.bf16.mxu0 0
    %478 = vmatpush1.bf16.msra.mxu0 %v455
    %479 = vmatprep.subr.bf16.mxu0 0
    %480 = vmatpush1.bf16.msra.mxu0 %v456
    %481 = vmatprep.subr.bf16.mxu0 0
    %482 = vmatpush1.bf16.msra.mxu0 0
    %483 = vmatprep.subr.bf16.mxu0 0
    %484 = vmatpush1.bf16.msra.mxu0 0
    %485 = vmatprep.subr.bf16.mxu0 0
    %486 = vmatpush1.bf16.msra.mxu0 0
    %487 = vmatprep.subr.bf16.mxu0 0
    %488 = vmatpush1.bf16.msra.mxu0 0
    %489 = vmatprep.subr.bf16.mxu0 0
    %490 = vmatpush1.bf16.msra.mxu0 0
    %491 = vmatprep.subr.bf16.mxu0 0
    %492 = vmatpush1.bf16.msra.mxu0 0
    %493 = vmatprep.subr.bf16.mxu0 0
    %494 = vmatpush1.bf16.msra.mxu0 0
    %495 = vmatprep.subr.bf16.mxu0 0
    %496 = vmatpush1.bf16.msra.mxu0 0
    %497 = vmatprep.mubr.bf16.mxu0 0
    %498 = vmatmul.mubr.bf16.gmra.mrb[0].mxu0 %v91
    %v499 = vpop.f32.mrb[0].mxu0
    %v500 = vadd.f32 %v415, %v499
    %v501 = vpop.f32.mrb[0].mxu0
    %v502 = vpop.f32.mrb[0].mxu0
    %v503 = vpop.f32.mrb[0].mxu0
    %504 = vdwg.mxu0
    %v505 = vpack.c.bf16 %v215, %v215
    %506 = vst [vmem:[%s9] sm:$0xf] %v505
    %v507 = vpack.c.bf16 %v309, %v309
    %508 = vst [vmem:[%s10] sm:$0xf] %v507
    %v509 = vpack.c.bf16 %v349, %v349
    %510 = vst [vmem:[%s11] sm:$0xf] %v509
    %v511 = vpack.c.bf16 %v389, %v389
    %512 = vst [vmem:[%s12] sm:$0xf] %v511
    %v513 = vpack.c.bf16 %v500, %v500
    %514 = vst [vmem:[%s13] sm:$0xf] %v513
    // Predicated region
    $region54: #{attention_module_forward.2} parent=1 // pred_check
      _
    $region55: #{attention_module_forward.2} parent=1 // pred_check_branch
      %516 = sbr.rel (0) target = $region57
    $region56: #{attention_module_forward.2} parent=1 // pred_region
      _
    $region57: #{attention_module_forward.2} parent=1 // pred_fallthru
      _
    // Predicated region
    $region58: #{attention_module_forward.2} parent=1 // pred_check
      _
    $region59: #{attention_module_forward.2} parent=1 // pred_check_branch
      %518 = sbr.rel (0) target = $region61
    $region60: #{attention_module_forward.2} parent=1 // pred_region
      _
    $region61: #{attention_module_forward.2} parent=1 // pred_fallthru
      _
    // Predicated region
    $region62: #{attention_module_forward.2} parent=1 // pred_check
      _
    $region63: #{attention_module_forward.2} parent=1 // pred_check_branch
      %520 = sbr.rel (0) target = $region65
    $region64: #{attention_module_forward.2} parent=1 // pred_region
      _
    $region65: #{attention_module_forward.2} parent=1 // pred_fallthru
      _
    // Predicated region
    $region66: #{attention_module_forward.2} parent=1 // pred_check
      _
    $region67: #{attention_module_forward.2} parent=1 // pred_check_branch
      %522 = sbr.rel (0) target = $region69
    $region68: #{attention_module_forward.2} parent=1 // pred_region
      _
    $region69: #{attention_module_forward.2} parent=1 // pred_fallthru
      _
    // Predicated region
    $region70: #{attention_module_forward.2} parent=1 // pred_check
      _
    $region71: #{attention_module_forward.2} parent=1 // pred_check_branch
      %524 = sbr.rel (0) target = $region73
    $region72: #{attention_module_forward.2} parent=1 // pred_region
      _
    $region73: #{attention_module_forward.2} parent=1 // pred_fallthru
      _
    // Predicated region
    $region74: #{attention_module_forward.2} parent=1 // pred_check
      _
    $region75: #{attention_module_forward.2} parent=1 // pred_check_branch
      %526 = sbr.rel (0) target = $region77
    $region76: #{attention_module_forward.2} parent=1 // pred_region
      _
    $region77: #{attention_module_forward.2} parent=1 // pred_fallthru
      _
    // Predicated region
    $region78: #{attention_module_forward.2} parent=1 // pred_check
      _
    $region79: #{attention_module_forward.2} parent=1 // pred_check_branch
      %528 = sbr.rel (0) target = $region81
    $region80: #{attention_module_forward.2} parent=1 // pred_region
      _
    $region81: #{attention_module_forward.2} parent=1 // pred_fallthru
      _
    // Predicated region
    $region82: #{attention_module_forward.2} parent=1 // pred_check
      _
    $region83: #{attention_module_forward.2} parent=1 // pred_check_branch
      %530 = sbr.rel (0) target = $region85
    $region84: #{attention_module_forward.2} parent=1 // pred_region
      _
    $region85: #{attention_module_forward.2} parent=1 // pred_fallthru
      _
    // Predicated region
    $region86: #{attention_module_forward.2} parent=1 // pred_check
      _
    $region87: #{attention_module_forward.2} parent=1 // pred_check_branch
      %532 = sbr.rel (0) target = $region89
    $region88: #{attention_module_forward.2} parent=1 // pred_region
      _
    $region89: #{attention_module_forward.2} parent=1 // pred_fallthru
      _
    // Predicated region
    $region90: #{attention_module_forward.2} parent=1 // pred_check
      _
    $region91: #{attention_module_forward.2} parent=1 // pred_check_branch
      %534 = sbr.rel (0) target = $region93
    $region92: #{attention_module_forward.2} parent=1 // pred_region
      _
    $region93: #{attention_module_forward.2} parent=1 // pred_fallthru
      _
    %535 = vsyncpa [#allocation3], 1
    %536 = vsyncpa [#allocation5], 1
    %537 = vsyncpa [#allocation8], 1

</llo_original>
